<compile_context>
chip_gen: v7x
topology: tpu7x:2x2x1
jax: 0.10.0
libtpu: 0.0.40
codegen_flags: <defaults>
</compile_context>

<pallas_src>
import jax
import jax.numpy as jnp
from jax.experimental import pallas as pl
from jax.experimental.pallas import tpu as pltpu

EPS = 1e-5


# ---------------------------------------------------------------------------
# Positional encoding table (parameter setup glue, plain JAX)
# ---------------------------------------------------------------------------
def get_positional_encoding(n_positions, d_hid, T=1000):
    pos = jnp.arange(n_positions, dtype=jnp.float32)[:, None]          # (P, 1)
    i = jnp.arange(d_hid, dtype=jnp.float32)[None, :]                  # (1, D)
    angle = pos / jnp.power(float(T), 2.0 * jnp.floor(i / 2.0) / d_hid)
    table = jnp.where(jnp.mod(i, 2.0) == 0.0, jnp.sin(angle), jnp.cos(angle))
    return table.astype(jnp.float32)                                   # (P, D)


# ---------------------------------------------------------------------------
# Fused Pallas kernel: Conv1d(k=3,pad=1)+BN+ReLU stack  ->  FC+BN+ReLU stack
# ---------------------------------------------------------------------------
def _make_fused_kernel(n_conv, n_fc, T, conv_in_widths):
    """Kernel over (mtile, Cin) rows (mtile = tb*T whole batch elements)."""

    def kernel(*refs):
        enc_ref = refs[0]
        conv_refs = refs[1:1 + 2 * n_conv]                 # (w3, shift) pairs
        fc_refs = refs[1 + 2 * n_conv:1 + 2 * (n_conv + n_fc)]
        o_ref = refs[1 + 2 * (n_conv + n_fc)]

        h = enc_ref[...].astype(jnp.float32)               # (M, Cin), f32 work
        M = h.shape[0]
        tb = M // T

        # Time index of each row inside its batch element (block starts are
        # multiples of T, so the intra-block iota modulo T is the true t).
        t_idx = jax.lax.broadcasted_iota(jnp.int32, (M, 1), 0) % T
        not_first = t_idx != 0          # t == 0     -> left halo is zero pad
        not_last = t_idx != (T - 1)     # t == T - 1 -> right halo is zero pad
        # Hoisted halo masks: one broadcast per distinct channel width (JAX
        # does not CSE broadcast_in_dim inside the unrolled layer loop).
        masks = {}
        for cw in set(conv_in_widths):
            masks[cw] = (jnp.broadcast_to(not_first, (M, cw)),
                         jnp.broadcast_to(not_last, (M, cw)))

        # ---- Conv1d(k=3, pad=1) + folded-BN + ReLU stack ----
        for li in range(n_conv):
            w_ref = conv_refs[2 * li]                       # (3, Cin_l, Cout_l) bf16
            shift = conv_refs[2 * li + 1][...]              # (1, Cout_l) f32
            nf, nl = masks[conv_in_widths[li]]
            # Halos via XLU sublane rolls, masked BEFORE the matmul so batch
            # boundaries see zero padding (never wrap-around rows).
            h_prev = jnp.where(nf, pltpu.roll(h, 1, 0), 0.0)        # x[t-1]
            h_next = jnp.where(nl, pltpu.roll(h, M - 1, 0), 0.0)    # x[t+1]
            # Three accumulated bf16 dots (no misaligned lane-axis concat).
            acc = jnp.dot(h_prev.astype(jnp.bfloat16), w_ref[0],
                          preferred_element_type=jnp.float32)
            acc = acc + jnp.dot(h.astype(jnp.bfloat16), w_ref[1],
                                preferred_element_type=jnp.float32)
            acc = acc + jnp.dot(h_next.astype(jnp.bfloat16), w_ref[2],
                                preferred_element_type=jnp.float32)
            h = jnp.maximum(acc + shift, 0.0)               # shift+ReLU in f32

        # ---- FC0: contract over (t, c) without leaving VMEM ----
        # Leading-dim split only (sublane regroup, T % 8 == 0 keeps it a
        # no-op relayout); the PyTorch channel-major flatten is baked into the
        # (T, C_last, F0) FC0 weight at init.
        c_last = h.shape[-1]
        h3 = h.reshape(tb, T, c_last)
        w0_ref = fc_refs[0]                                 # (T, C_last, F0) bf16
        acc = jnp.dot(h3[:, 0, :].astype(jnp.bfloat16), w0_ref[0],
                      preferred_element_type=jnp.float32)
        for t in range(1, T):
            acc = acc + jnp.dot(h3[:, t, :].astype(jnp.bfloat16), w0_ref[t],
                                preferred_element_type=jnp.float32)
        a = jnp.maximum(acc + fc_refs[1][...], 0.0)         # (tb, F0) f32

        # ---- Remaining FC + folded-BN + ReLU layers ----
        for li in range(1, n_fc):
            hb = a.astype(jnp.bfloat16)
            acc = jnp.dot(hb, fc_refs[2 * li][...],
                          preferred_element_type=jnp.float32)
            a = jnp.maximum(acc + fc_refs[2 * li + 1][...], 0.0)

        o_ref[...] = a.astype(o_ref.dtype)

    return kernel


# ---------------------------------------------------------------------------
# pallas_call wrapper
# ---------------------------------------------------------------------------
def _pick_batch_tile(B, T, target_rows=2048):
    # Whole batch elements per tile (so the k=3 halo never crosses a tile
    # boundary).  Alignment: either tb == B (full-dim blocks) or both the
    # (tb*T)-row input block and the tb-row output block are sublane aligned.
    cands = [tb for tb in range(1, B + 1)
             if B % tb == 0 and (tb == B or ((tb * T) % 8 == 0 and tb % 8 == 0))]
    fitting = [tb for tb in cands if tb * T <= target_rows] or [min(cands)]
    # Prefer >= 2 grid steps so "parallel" can shard across v7x's 2 TensorCores.
    multi = [tb for tb in fitting if B // tb >= 2]
    return max(multi) if multi else max(fitting)


def _const_spec(shape):
    n = len(shape)
    return pl.BlockSpec(shape, lambda i, _n=n: (0,) * _n)


def temp_conv_fused(enc, conv_params, fc_params, T):
    """enc: (B, T, Cin) bf16 (input + positional encoding).  -> (B, nfc[-1]) f32."""
    assert len(conv_params) >= 1 and len(fc_params) >= 1
    B, T_, cin = enc.shape
    assert T_ == T
    fout = fc_params[-1][0].shape[-1]
    tb = _pick_batch_tile(B, T)
    mtile = tb * T
    assert mtile % T == 0                       # whole batch elements per tile
    M = B * T

    enc2 = enc.reshape(M, cin)                  # free row-major view

    conv_in_widths = [w.shape[1] for (w, _) in conv_params]

    in_specs = [pl.BlockSpec((mtile, cin), lambda i: (i, 0))]
    args = [enc2]
    for (w, s) in list(conv_params) + list(fc_params):
        in_specs += [_const_spec(w.shape), _const_spec(s.shape)]
        args += [w, s]

    # Cost estimate (advisory, for XLA scheduling of surrounding glue).
    conv_flops = 2 * M * sum(w.shape[0] * w.shape[1] * w.shape[2]
                             for (w, _) in conv_params)
    fc0_w = fc_params[0][0]
    fc_flops = 2 * B * (fc0_w.shape[0] * fc0_w.shape[1] * fc0_w.shape[2]
                        + sum(w.shape[0] * w.shape[1] for (w, _) in fc_params[1:]))
    param_bytes = sum(int(w.size) * w.dtype.itemsize + int(s.size) * s.dtype.itemsize
                      for (w, s) in list(conv_params) + list(fc_params))
    bytes_accessed = int(enc2.size) * enc2.dtype.itemsize + param_bytes + B * fout * 4

    # VMEM budget: double-buffered input/output blocks + (still 2x-buffered)
    # constant-index params + f32 activation headroom.
    max_width = max([cin] + [w.shape[2] for (w, _) in conv_params])
    act_bytes = 4 * mtile * max_width
    vmem_needed = (2 * mtile * cin * enc2.dtype.itemsize + 2 * param_bytes
                   + 2 * tb * fout * 4 + 8 * act_bytes + (2 << 20))
    vmem_limit = int(min(64 * 2**20, max(vmem_needed, 16 * 2**20)))

    kernel = _make_fused_kernel(len(conv_params), len(fc_params), T, conv_in_widths)

    return pl.pallas_call(
        kernel,
        out_shape=jax.ShapeDtypeStruct((B, fout), jnp.float32),
        grid_spec=pltpu.PrefetchScalarGridSpec(
            num_scalar_prefetch=0,
            grid=(B // tb,),
            in_specs=in_specs,
            out_specs=pl.BlockSpec((tb, fout), lambda i: (i, 0)),
        ),
        compiler_params=pltpu.CompilerParams(
            dimension_semantics=("parallel",),
            vmem_limit_bytes=vmem_limit,
        ),
        cost_estimate=pl.CostEstimate(flops=int(conv_flops + fc_flops),
                                      transcendentals=0,
                                      bytes_accessed=int(bytes_accessed)),
    )(*args)


# ---------------------------------------------------------------------------
# Parameter initialization (deterministic, synthetic)
# ---------------------------------------------------------------------------
def _fold_bn_into_weight(w, bias, gamma, beta, mean, var):
    # y = Wx + b ; BN(y) = scale*(y - mean) + beta  with scale = gamma/sqrt(var+eps)
    scale = gamma / jnp.sqrt(var + EPS)             # (Cout,)
    w_folded = w * scale                            # fold scale into weight
    shift = (bias - mean) * scale + beta            # single additive epilogue
    return w_folded, shift[None, :]                 # (..., Cout), (1, Cout)


def init_params(key, input_size, nker, seq_len, nfc,
                max_position=365, max_temporal_shift=100):
    nker_full = [input_size] + list(nker)
    nfc_full = [nker_full[-1] * seq_len] + list(nfc)

    params = {
        "max_temporal_shift": max_temporal_shift,
        # NOTE: original module uses undefined `self.in_channels`; it is the
        # input feature dimension (input_size).
        "pos_table": get_positional_encoding(
            max_position + 2 * max_temporal_shift, input_size, T=1000),
        "conv": [],
        "fc": [],
    }

    for i in range(len(nker_full) - 1):
        cin, cout = nker_full[i], nker_full[i + 1]
        key, k1, k2, k3, k4, k5, k6 = jax.random.split(key, 7)
        # Taps: 0 -> x[t-1], 1 -> x[t], 2 -> x[t+1] (Conv1d k=3, pad=1).
        w3 = jax.random.normal(k1, (3, cin, cout), jnp.float32) * 0.1
        b = jax.random.normal(k2, (cout,), jnp.float32) * 0.1
        gamma = jax.random.uniform(k3, (cout,), jnp.float32, 0.5, 1.5)
        beta = jax.random.normal(k4, (cout,), jnp.float32) * 0.1
        mean = jax.random.normal(k5, (cout,), jnp.float32) * 0.1
        var = jax.random.uniform(k6, (cout,), jnp.float32, 0.5, 1.5)
        wf, shift = _fold_bn_into_weight(w3, b, gamma, beta, mean, var)
        params["conv"].append((wf.astype(jnp.bfloat16), shift.astype(jnp.float32)))

    c_last, T = nker_full[-1], seq_len
    for i in range(len(nfc_full) - 1):
        fin, fout = nfc_full[i], nfc_full[i + 1]
        key, k1, k2, k3, k4, k5, k6 = jax.random.split(key, 7)
        w = jax.random.normal(k1, (fin, fout), jnp.float32) * 0.1
        b = jax.random.normal(k2, (fout,), jnp.float32) * 0.1
        gamma = jax.random.uniform(k3, (fout,), jnp.float32, 0.5, 1.5)
        beta = jax.random.normal(k4, (fout,), jnp.float32) * 0.1
        mean = jax.random.normal(k5, (fout,), jnp.float32) * 0.1
        var = jax.random.uniform(k6, (fout,), jnp.float32, 0.5, 1.5)
        wf, shift = _fold_bn_into_weight(w, b, gamma, beta, mean, var)
        if i == 0:
            # PyTorch flattens the conv output channel-major: fin = c*T + t.
            # Reshape/transpose the FC0 weight once at init to (T, C_last, F)
            # so the kernel contracts per-timestep with NO runtime transpose.
            wf = wf.reshape(c_last, T, fout).transpose(1, 0, 2)
        params["fc"].append((wf.astype(jnp.bfloat16), shift.astype(jnp.float32)))

    return params


# ---------------------------------------------------------------------------
# Forward pass
# ---------------------------------------------------------------------------
@jax.jit
def temp_conv_forward(params, x, positions):
    # x: (B, T, C) float32, positions: (B, T) int32.
    # Gather + positional add + bf16 cast fuse into one XLA producer; the
    # Pallas kernel reads a single bf16 (B*T, C) array (half the f32 bytes).
    pe = params["pos_table"][positions + params["max_temporal_shift"]]   # (B,T,C)
    enc = (x + pe).astype(jnp.bfloat16)
    T = x.shape[1]
    return temp_conv_fused(enc, params["conv"], params["fc"], T)


# ---------------------------------------------------------------------------
if __name__ == "__main__":
    B = 2
    input_size = 8
    seq_len = 8
    nker = [16, 16]
    nfc = [32, 8]
    max_position = 32
    max_temporal_shift = 4

    key = jax.random.PRNGKey(0)
    k_params, k_x, k_pos = jax.random.split(key, 3)

    params = init_params(k_params, input_size, nker, seq_len, nfc,
                         max_position=max_position,
                         max_temporal_shift=max_temporal_shift)

    x = jax.random.normal(k_x, (B, seq_len, input_size), jnp.float32)
    positions = jax.random.randint(k_pos, (B, seq_len), 0, max_position,
                                   dtype=jnp.int32)

    out = temp_conv_forward(params, x, positions)
    jax.block_until_ready(out)
    assert out.shape == (B, nfc[-1]), out.shape
    print("KERNEL_OK")
</pallas_src>

<mosaic_0001>
module attributes {stable_mosaic.version = 11 : i64} {
  func.func @kernel(%arg0: i32, %arg1: memref<16x8xbf16, #tpu.memory_space<vmem>>, %arg2: memref<3x8x16xbf16, #tpu.memory_space<vmem>>, %arg3: memref<1x16xf32, #tpu.memory_space<vmem>>, %arg4: memref<3x16x16xbf16, #tpu.memory_space<vmem>>, %arg5: memref<1x16xf32, #tpu.memory_space<vmem>>, %arg6: memref<8x16x32xbf16, #tpu.memory_space<vmem>>, %arg7: memref<1x32xf32, #tpu.memory_space<vmem>>, %arg8: memref<32x8xbf16, #tpu.memory_space<vmem>>, %arg9: memref<1x8xf32, #tpu.memory_space<vmem>>, %arg10: memref<2x8xf32, #tpu.memory_space<vmem>>) attributes {dimension_semantics = [#tpu.dimension_semantics<parallel>], iteration_bounds = array<i64: 1>, scalar_prefetch = 0 : i64, scratch_operands = 0 : i64, tpu.core_type = #tpu.core_type<tc>, window_params = [{transform_indices = @transform_0, window_bounds = array<i64: 16, 8>}, {pipeline_mode = #tpu.pipeline_mode<synchronous>, transform_indices = @transform_1, window_bounds = array<i64: 3, 8, 16>}, {pipeline_mode = #tpu.pipeline_mode<synchronous>, transform_indices = @transform_2, window_bounds = array<i64: 1, 16>}, {pipeline_mode = #tpu.pipeline_mode<synchronous>, transform_indices = @transform_3, window_bounds = array<i64: 3, 16, 16>}, {pipeline_mode = #tpu.pipeline_mode<synchronous>, transform_indices = @transform_4, window_bounds = array<i64: 1, 16>}, {pipeline_mode = #tpu.pipeline_mode<synchronous>, transform_indices = @transform_5, window_bounds = array<i64: 8, 16, 32>}, {pipeline_mode = #tpu.pipeline_mode<synchronous>, transform_indices = @transform_6, window_bounds = array<i64: 1, 32>}, {pipeline_mode = #tpu.pipeline_mode<synchronous>, transform_indices = @transform_7, window_bounds = array<i64: 32, 8>}, {pipeline_mode = #tpu.pipeline_mode<synchronous>, transform_indices = @transform_8, window_bounds = array<i64: 1, 8>}, {transform_indices = @transform_9, window_bounds = array<i64: 2, 8>}]} {
    %c0 = arith.constant 0 : index
    %c0_0 = arith.constant 0 : index
    %0 = vector.load %arg1[%c0, %c0_0] : memref<16x8xbf16, #tpu.memory_space<vmem>>, vector<16x8xbf16>
    %1 = arith.extf %0 : vector<16x8xbf16> to vector<16x8xf32>
    %2 = tpu.iota {dimensions = array<i32: 0>} : vector<16x1xi32>
    %c8_i32 = arith.constant 8 : i32
    %c0_i32 = arith.constant 0 : i32
    %3 = arith.cmpi eq, %c8_i32, %c0_i32 : i32
    %c1_i32 = arith.constant 1 : i32
    %4 = arith.select %3, %c1_i32, %c8_i32 : i32
    %5 = vector.broadcast %4 : i32 to vector<16x1xi32>
    %6 = arith.remsi %2, %5 : vector<16x1xi32>
    %c0_i32_1 = arith.constant 0 : i32
    %7 = vector.broadcast %c0_i32_1 : i32 to vector<16x1xi32>
    %8 = arith.cmpi ne, %6, %7 : vector<16x1xi32>
    %c0_i32_2 = arith.constant 0 : i32
    %9 = vector.broadcast %c0_i32_2 : i32 to vector<16x1xi32>
    %10 = arith.cmpi slt, %6, %9 : vector<16x1xi32>
    %c0_i32_3 = arith.constant 0 : i32
    %11 = arith.cmpi slt, %4, %c0_i32_3 : i32
    %12 = vector.broadcast %11 : i1 to vector<16x1xi1>
    %13 = vector.broadcast %12 : vector<16x1xi1> to vector<16x1xi1>
    %14 = arith.xori %10, %13 : vector<16x1xi1>
    %15 = arith.andi %14, %8 : vector<16x1xi1>
    %16 = vector.broadcast %4 : i32 to vector<16x1xi32>
    %17 = arith.addi %6, %16 : vector<16x1xi32>
    %18 = arith.select %15, %17, %6 : vector<16x1xi1>, vector<16x1xi32>
    %c0_i32_4 = arith.constant 0 : i32
    %19 = vector.broadcast %c0_i32_4 : i32 to vector<16x1xi32>
    %20 = arith.cmpi ne, %18, %19 : vector<16x1xi32>
    %c7_i32 = arith.constant 7 : i32
    %21 = vector.broadcast %c7_i32 : i32 to vector<16x1xi32>
    %22 = arith.cmpi ne, %18, %21 : vector<16x1xi32>
    %23 = vector.shape_cast %20 : vector<16x1xi1> to vector<16x1xi1>
    %24 = vector.broadcast %23 : vector<16x1xi1> to vector<16x8xi1>
    %25 = vector.shape_cast %22 : vector<16x1xi1> to vector<16x1xi1>
    %26 = vector.broadcast %25 : vector<16x1xi1> to vector<16x8xi1>
    %27 = vector.shape_cast %20 : vector<16x1xi1> to vector<16x1xi1>
    %28 = vector.broadcast %27 : vector<16x1xi1> to vector<16x16xi1>
    %29 = vector.shape_cast %22 : vector<16x1xi1> to vector<16x1xi1>
    %30 = vector.broadcast %29 : vector<16x1xi1> to vector<16x16xi1>
    %c0_5 = arith.constant 0 : index
    %c0_6 = arith.constant 0 : index
    %31 = vector.load %arg3[%c0_5, %c0_6] : memref<1x16xf32, #tpu.memory_space<vmem>>, vector<1x16xf32>
    %c1_i32_7 = arith.constant 1 : i32
    %32 = tpu.dynamic_rotate %1 by %c1_i32_7 dim 0 : vector<16x8xf32>, i32 -> vector<16x8xf32>
    %cst = arith.constant 0.000000e+00 : f32
    %33 = vector.broadcast %cst : f32 to vector<16x8xf32>
    %34 = arith.select %24, %32, %33 : vector<16x8xi1>, vector<16x8xf32>
    %c15_i32 = arith.constant 15 : i32
    %35 = tpu.dynamic_rotate %1 by %c15_i32 dim 0 : vector<16x8xf32>, i32 -> vector<16x8xf32>
    %cst_8 = arith.constant 0.000000e+00 : f32
    %36 = vector.broadcast %cst_8 : f32 to vector<16x8xf32>
    %37 = arith.select %26, %35, %36 : vector<16x8xi1>, vector<16x8xf32>
    %38 = arith.truncf %34 : vector<16x8xf32> to vector<16x8xbf16>
    %c0_9 = arith.constant 0 : index
    %c0_10 = arith.constant 0 : index
    %c0_11 = arith.constant 0 : index
    %39 = vector.load %arg2[%c0_9, %c0_10, %c0_11] : memref<3x8x16xbf16, #tpu.memory_space<vmem>>, vector<1x8x16xbf16>
    %40 = vector.shape_cast %39 : vector<1x8x16xbf16> to vector<8x16xbf16>
    %cst_12 = arith.constant dense<0.000000e+00> : vector<16x16xf32>
    %41 = tpu.matmul %38, %40, %cst_12 {dimension_numbers = #tpu.dot_dimension_numbers<[1], [0], [0], [1], [0, 0, 1, 1], [], []>} : vector<16x8xbf16>, vector<8x16xbf16>, vector<16x16xf32> -> vector<16x16xf32>
    %42 = arith.truncf %1 : vector<16x8xf32> to vector<16x8xbf16>
    %c1 = arith.constant 1 : index
    %c0_13 = arith.constant 0 : index
    %c0_14 = arith.constant 0 : index
    %43 = vector.load %arg2[%c1, %c0_13, %c0_14] : memref<3x8x16xbf16, #tpu.memory_space<vmem>>, vector<1x8x16xbf16>
    %44 = vector.shape_cast %43 : vector<1x8x16xbf16> to vector<8x16xbf16>
    %cst_15 = arith.constant dense<0.000000e+00> : vector<16x16xf32>
    %45 = tpu.matmul %42, %44, %cst_15 {dimension_numbers = #tpu.dot_dimension_numbers<[1], [0], [0], [1], [0, 0, 1, 1], [], []>} : vector<16x8xbf16>, vector<8x16xbf16>, vector<16x16xf32> -> vector<16x16xf32>
    %46 = arith.addf %41, %45 : vector<16x16xf32>
    %47 = arith.truncf %37 : vector<16x8xf32> to vector<16x8xbf16>
    %c2 = arith.constant 2 : index
    %c0_16 = arith.constant 0 : index
    %c0_17 = arith.constant 0 : index
    %48 = vector.load %arg2[%c2, %c0_16, %c0_17] : memref<3x8x16xbf16, #tpu.memory_space<vmem>>, vector<1x8x16xbf16>
    %49 = vector.shape_cast %48 : vector<1x8x16xbf16> to vector<8x16xbf16>
    %cst_18 = arith.constant dense<0.000000e+00> : vector<16x16xf32>
    %50 = tpu.matmul %47, %49, %cst_18 {dimension_numbers = #tpu.dot_dimension_numbers<[1], [0], [0], [1], [0, 0, 1, 1], [], []>} : vector<16x8xbf16>, vector<8x16xbf16>, vector<16x16xf32> -> vector<16x16xf32>
    %51 = arith.addf %46, %50 : vector<16x16xf32>
    %52 = vector.broadcast %31 : vector<1x16xf32> to vector<16x16xf32>
    %53 = arith.addf %51, %52 : vector<16x16xf32>
    %cst_19 = arith.constant 0.000000e+00 : f32
    %54 = vector.broadcast %cst_19 : f32 to vector<16x16xf32>
    %55 = arith.maximumf %53, %54 : vector<16x16xf32>
    %c0_20 = arith.constant 0 : index
    %c0_21 = arith.constant 0 : index
    %56 = vector.load %arg5[%c0_20, %c0_21] : memref<1x16xf32, #tpu.memory_space<vmem>>, vector<1x16xf32>
    %c1_i32_22 = arith.constant 1 : i32
    %57 = tpu.dynamic_rotate %55 by %c1_i32_22 dim 0 : vector<16x16xf32>, i32 -> vector<16x16xf32>
    %cst_23 = arith.constant 0.000000e+00 : f32
    %58 = vector.broadcast %cst_23 : f32 to vector<16x16xf32>
    %59 = arith.select %28, %57, %58 : vector<16x16xi1>, vector<16x16xf32>
    %c15_i32_24 = arith.constant 15 : i32
    %60 = tpu.dynamic_rotate %55 by %c15_i32_24 dim 0 : vector<16x16xf32>, i32 -> vector<16x16xf32>
    %cst_25 = arith.constant 0.000000e+00 : f32
    %61 = vector.broadcast %cst_25 : f32 to vector<16x16xf32>
    %62 = arith.select %30, %60, %61 : vector<16x16xi1>, vector<16x16xf32>
    %63 = arith.truncf %59 : vector<16x16xf32> to vector<16x16xbf16>
    %c0_26 = arith.constant 0 : index
    %c0_27 = arith.constant 0 : index
    %c0_28 = arith.constant 0 : index
    %64 = vector.load %arg4[%c0_26, %c0_27, %c0_28] : memref<3x16x16xbf16, #tpu.memory_space<vmem>>, vector<1x16x16xbf16>
    %65 = vector.shape_cast %64 : vector<1x16x16xbf16> to vector<16x16xbf16>
    %cst_29 = arith.constant dense<0.000000e+00> : vector<16x16xf32>
    %66 = tpu.matmul %63, %65, %cst_29 {dimension_numbers = #tpu.dot_dimension_numbers<[1], [0], [0], [1], [0, 0, 1, 1], [], []>} : vector<16x16xbf16>, vector<16x16xbf16>, vector<16x16xf32> -> vector<16x16xf32>
    %67 = arith.truncf %55 : vector<16x16xf32> to vector<16x16xbf16>
    %c1_30 = arith.constant 1 : index
    %c0_31 = arith.constant 0 : index
    %c0_32 = arith.constant 0 : index
    %68 = vector.load %arg4[%c1_30, %c0_31, %c0_32] : memref<3x16x16xbf16, #tpu.memory_space<vmem>>, vector<1x16x16xbf16>
    %69 = vector.shape_cast %68 : vector<1x16x16xbf16> to vector<16x16xbf16>
    %cst_33 = arith.constant dense<0.000000e+00> : vector<16x16xf32>
    %70 = tpu.matmul %67, %69, %cst_33 {dimension_numbers = #tpu.dot_dimension_numbers<[1], [0], [0], [1], [0, 0, 1, 1], [], []>} : vector<16x16xbf16>, vector<16x16xbf16>, vector<16x16xf32> -> vector<16x16xf32>
    %71 = arith.addf %66, %70 : vector<16x16xf32>
    %72 = arith.truncf %62 : vector<16x16xf32> to vector<16x16xbf16>
    %c2_34 = arith.constant 2 : index
    %c0_35 = arith.constant 0 : index
    %c0_36 = arith.constant 0 : index
    %73 = vector.load %arg4[%c2_34, %c0_35, %c0_36] : memref<3x16x16xbf16, #tpu.memory_space<vmem>>, vector<1x16x16xbf16>
    %74 = vector.shape_cast %73 : vector<1x16x16xbf16> to vector<16x16xbf16>
    %cst_37 = arith.constant dense<0.000000e+00> : vector<16x16xf32>
    %75 = tpu.matmul %72, %74, %cst_37 {dimension_numbers = #tpu.dot_dimension_numbers<[1], [0], [0], [1], [0, 0, 1, 1], [], []>} : vector<16x16xbf16>, vector<16x16xbf16>, vector<16x16xf32> -> vector<16x16xf32>
    %76 = arith.addf %71, %75 : vector<16x16xf32>
    %77 = vector.broadcast %56 : vector<1x16xf32> to vector<16x16xf32>
    %78 = arith.addf %76, %77 : vector<16x16xf32>
    %cst_38 = arith.constant 0.000000e+00 : f32
    %79 = vector.broadcast %cst_38 : f32 to vector<16x16xf32>
    %80 = arith.maximumf %78, %79 : vector<16x16xf32>
    %81 = vector.shape_cast %80 : vector<16x16xf32> to vector<2x8x16xf32>
    %82 = vector.extract_strided_slice %81 {offsets = [0, 0, 0], sizes = [2, 1, 16], strides = [1, 1, 1]} : vector<2x8x16xf32> to vector<2x1x16xf32>
    %83 = vector.shape_cast %82 : vector<2x1x16xf32> to vector<2x16xf32>
    %84 = arith.truncf %83 : vector<2x16xf32> to vector<2x16xbf16>
    %c0_39 = arith.constant 0 : index
    %c0_40 = arith.constant 0 : index
    %c0_41 = arith.constant 0 : index
    %85 = vector.load %arg6[%c0_39, %c0_40, %c0_41] : memref<8x16x32xbf16, #tpu.memory_space<vmem>>, vector<1x16x32xbf16>
    %86 = vector.shape_cast %85 : vector<1x16x32xbf16> to vector<16x32xbf16>
    %cst_42 = arith.constant dense<0.000000e+00> : vector<2x32xf32>
    %87 = tpu.matmul %84, %86, %cst_42 {dimension_numbers = #tpu.dot_dimension_numbers<[1], [0], [0], [1], [0, 0, 1, 1], [], []>} : vector<2x16xbf16>, vector<16x32xbf16>, vector<2x32xf32> -> vector<2x32xf32>
    %88 = vector.extract_strided_slice %81 {offsets = [0, 1, 0], sizes = [2, 1, 16], strides = [1, 1, 1]} : vector<2x8x16xf32> to vector<2x1x16xf32>
    %89 = vector.shape_cast %88 : vector<2x1x16xf32> to vector<2x16xf32>
    %90 = arith.truncf %89 : vector<2x16xf32> to vector<2x16xbf16>
    %c1_43 = arith.constant 1 : index
    %c0_44 = arith.constant 0 : index
    %c0_45 = arith.constant 0 : index
    %91 = vector.load %arg6[%c1_43, %c0_44, %c0_45] : memref<8x16x32xbf16, #tpu.memory_space<vmem>>, vector<1x16x32xbf16>
    %92 = vector.shape_cast %91 : vector<1x16x32xbf16> to vector<16x32xbf16>
    %cst_46 = arith.constant dense<0.000000e+00> : vector<2x32xf32>
    %93 = tpu.matmul %90, %92, %cst_46 {dimension_numbers = #tpu.dot_dimension_numbers<[1], [0], [0], [1], [0, 0, 1, 1], [], []>} : vector<2x16xbf16>, vector<16x32xbf16>, vector<2x32xf32> -> vector<2x32xf32>
    %94 = arith.addf %87, %93 : vector<2x32xf32>
    %95 = vector.extract_strided_slice %81 {offsets = [0, 2, 0], sizes = [2, 1, 16], strides = [1, 1, 1]} : vector<2x8x16xf32> to vector<2x1x16xf32>
    %96 = vector.shape_cast %95 : vector<2x1x16xf32> to vector<2x16xf32>
    %97 = arith.truncf %96 : vector<2x16xf32> to vector<2x16xbf16>
    %c2_47 = arith.constant 2 : index
    %c0_48 = arith.constant 0 : index
    %c0_49 = arith.constant 0 : index
    %98 = vector.load %arg6[%c2_47, %c0_48, %c0_49] : memref<8x16x32xbf16, #tpu.memory_space<vmem>>, vector<1x16x32xbf16>
    %99 = vector.shape_cast %98 : vector<1x16x32xbf16> to vector<16x32xbf16>
    %cst_50 = arith.constant dense<0.000000e+00> : vector<2x32xf32>
    %100 = tpu.matmul %97, %99, %cst_50 {dimension_numbers = #tpu.dot_dimension_numbers<[1], [0], [0], [1], [0, 0, 1, 1], [], []>} : vector<2x16xbf16>, vector<16x32xbf16>, vector<2x32xf32> -> vector<2x32xf32>
    %101 = arith.addf %94, %100 : vector<2x32xf32>
    %102 = vector.extract_strided_slice %81 {offsets = [0, 3, 0], sizes = [2, 1, 16], strides = [1, 1, 1]} : vector<2x8x16xf32> to vector<2x1x16xf32>
    %103 = vector.shape_cast %102 : vector<2x1x16xf32> to vector<2x16xf32>
    %104 = arith.truncf %103 : vector<2x16xf32> to vector<2x16xbf16>
    %c3 = arith.constant 3 : index
    %c0_51 = arith.constant 0 : index
    %c0_52 = arith.constant 0 : index
    %105 = vector.load %arg6[%c3, %c0_51, %c0_52] : memref<8x16x32xbf16, #tpu.memory_space<vmem>>, vector<1x16x32xbf16>
    %106 = vector.shape_cast %105 : vector<1x16x32xbf16> to vector<16x32xbf16>
    %cst_53 = arith.constant dense<0.000000e+00> : vector<2x32xf32>
    %107 = tpu.matmul %104, %106, %cst_53 {dimension_numbers = #tpu.dot_dimension_numbers<[1], [0], [0], [1], [0, 0, 1, 1], [], []>} : vector<2x16xbf16>, vector<16x32xbf16>, vector<2x32xf32> -> vector<2x32xf32>
    %108 = arith.addf %101, %107 : vector<2x32xf32>
    %109 = vector.extract_strided_slice %81 {offsets = [0, 4, 0], sizes = [2, 1, 16], strides = [1, 1, 1]} : vector<2x8x16xf32> to vector<2x1x16xf32>
    %110 = vector.shape_cast %109 : vector<2x1x16xf32> to vector<2x16xf32>
    %111 = arith.truncf %110 : vector<2x16xf32> to vector<2x16xbf16>
    %c4 = arith.constant 4 : index
    %c0_54 = arith.constant 0 : index
    %c0_55 = arith.constant 0 : index
    %112 = vector.load %arg6[%c4, %c0_54, %c0_55] : memref<8x16x32xbf16, #tpu.memory_space<vmem>>, vector<1x16x32xbf16>
    %113 = vector.shape_cast %112 : vector<1x16x32xbf16> to vector<16x32xbf16>
    %cst_56 = arith.constant dense<0.000000e+00> : vector<2x32xf32>
    %114 = tpu.matmul %111, %113, %cst_56 {dimension_numbers = #tpu.dot_dimension_numbers<[1], [0], [0], [1], [0, 0, 1, 1], [], []>} : vector<2x16xbf16>, vector<16x32xbf16>, vector<2x32xf32> -> vector<2x32xf32>
    %115 = arith.addf %108, %114 : vector<2x32xf32>
    %116 = vector.extract_strided_slice %81 {offsets = [0, 5, 0], sizes = [2, 1, 16], strides = [1, 1, 1]} : vector<2x8x16xf32> to vector<2x1x16xf32>
    %117 = vector.shape_cast %116 : vector<2x1x16xf32> to vector<2x16xf32>
    %118 = arith.truncf %117 : vector<2x16xf32> to vector<2x16xbf16>
    %c5 = arith.constant 5 : index
    %c0_57 = arith.constant 0 : index
    %c0_58 = arith.constant 0 : index
    %119 = vector.load %arg6[%c5, %c0_57, %c0_58] : memref<8x16x32xbf16, #tpu.memory_space<vmem>>, vector<1x16x32xbf16>
    %120 = vector.shape_cast %119 : vector<1x16x32xbf16> to vector<16x32xbf16>
    %cst_59 = arith.constant dense<0.000000e+00> : vector<2x32xf32>
    %121 = tpu.matmul %118, %120, %cst_59 {dimension_numbers = #tpu.dot_dimension_numbers<[1], [0], [0], [1], [0, 0, 1, 1], [], []>} : vector<2x16xbf16>, vector<16x32xbf16>, vector<2x32xf32> -> vector<2x32xf32>
    %122 = arith.addf %115, %121 : vector<2x32xf32>
    %123 = vector.extract_strided_slice %81 {offsets = [0, 6, 0], sizes = [2, 1, 16], strides = [1, 1, 1]} : vector<2x8x16xf32> to vector<2x1x16xf32>
    %124 = vector.shape_cast %123 : vector<2x1x16xf32> to vector<2x16xf32>
    %125 = arith.truncf %124 : vector<2x16xf32> to vector<2x16xbf16>
    %c6 = arith.constant 6 : index
    %c0_60 = arith.constant 0 : index
    %c0_61 = arith.constant 0 : index
    %126 = vector.load %arg6[%c6, %c0_60, %c0_61] : memref<8x16x32xbf16, #tpu.memory_space<vmem>>, vector<1x16x32xbf16>
    %127 = vector.shape_cast %126 : vector<1x16x32xbf16> to vector<16x32xbf16>
    %cst_62 = arith.constant dense<0.000000e+00> : vector<2x32xf32>
    %128 = tpu.matmul %125, %127, %cst_62 {dimension_numbers = #tpu.dot_dimension_numbers<[1], [0], [0], [1], [0, 0, 1, 1], [], []>} : vector<2x16xbf16>, vector<16x32xbf16>, vector<2x32xf32> -> vector<2x32xf32>
    %129 = arith.addf %122, %128 : vector<2x32xf32>
    %130 = vector.extract_strided_slice %81 {offsets = [0, 7, 0], sizes = [2, 1, 16], strides = [1, 1, 1]} : vector<2x8x16xf32> to vector<2x1x16xf32>
    %131 = vector.shape_cast %130 : vector<2x1x16xf32> to vector<2x16xf32>
    %132 = arith.truncf %131 : vector<2x16xf32> to vector<2x16xbf16>
    %c7 = arith.constant 7 : index
    %c0_63 = arith.constant 0 : index
    %c0_64 = arith.constant 0 : index
    %133 = vector.load %arg6[%c7, %c0_63, %c0_64] : memref<8x16x32xbf16, #tpu.memory_space<vmem>>, vector<1x16x32xbf16>
    %134 = vector.shape_cast %133 : vector<1x16x32xbf16> to vector<16x32xbf16>
    %cst_65 = arith.constant dense<0.000000e+00> : vector<2x32xf32>
    %135 = tpu.matmul %132, %134, %cst_65 {dimension_numbers = #tpu.dot_dimension_numbers<[1], [0], [0], [1], [0, 0, 1, 1], [], []>} : vector<2x16xbf16>, vector<16x32xbf16>, vector<2x32xf32> -> vector<2x32xf32>
    %136 = arith.addf %129, %135 : vector<2x32xf32>
    %c0_66 = arith.constant 0 : index
    %c0_67 = arith.constant 0 : index
    %137 = vector.load %arg7[%c0_66, %c0_67] : memref<1x32xf32, #tpu.memory_space<vmem>>, vector<1x32xf32>
    %138 = vector.broadcast %137 : vector<1x32xf32> to vector<2x32xf32>
    %139 = arith.addf %136, %138 : vector<2x32xf32>
    %cst_68 = arith.constant 0.000000e+00 : f32
    %140 = vector.broadcast %cst_68 : f32 to vector<2x32xf32>
    %141 = arith.maximumf %139, %140 : vector<2x32xf32>
    %142 = arith.truncf %141 : vector<2x32xf32> to vector<2x32xbf16>
    %c0_69 = arith.constant 0 : index
    %c0_70 = arith.constant 0 : index
    %143 = vector.load %arg8[%c0_69, %c0_70] : memref<32x8xbf16, #tpu.memory_space<vmem>>, vector<32x8xbf16>
    %cst_71 = arith.constant dense<0.000000e+00> : vector<2x8xf32>
    %144 = tpu.matmul %142, %143, %cst_71 {dimension_numbers = #tpu.dot_dimension_numbers<[1], [0], [0], [1], [0, 0, 1, 1], [], []>} : vector<2x32xbf16>, vector<32x8xbf16>, vector<2x8xf32> -> vector<2x8xf32>
    %c0_72 = arith.constant 0 : index
    %c0_73 = arith.constant 0 : index
    %145 = vector.load %arg9[%c0_72, %c0_73] : memref<1x8xf32, #tpu.memory_space<vmem>>, vector<1x8xf32>
    %146 = vector.broadcast %145 : vector<1x8xf32> to vector<2x8xf32>
    %147 = arith.addf %144, %146 : vector<2x8xf32>
    %cst_74 = arith.constant 0.000000e+00 : f32
    %148 = vector.broadcast %cst_74 : f32 to vector<2x8xf32>
    %149 = arith.maximumf %147, %148 : vector<2x8xf32>
    %c0_75 = arith.constant 0 : index
    %c0_76 = arith.constant 0 : index
    %150 = vector.load %arg10[%c0_75, %c0_76] : memref<2x8xf32, #tpu.memory_space<vmem>>, vector<2x8xf32>
    tpu.vector_store %arg10[%c0_75, %c0_76], %149 {strides = array<i32>} : memref<2x8xf32, #tpu.memory_space<vmem>>, vector<2x8xf32>,
    return
  }
  func.func @transform_0(%arg0: i32) -> (i32, i32) {
    %c0_i32 = arith.constant 0 : i32
    %c0_i32_0 = arith.constant 0 : i32
    return %arg0, %c0_i32 : i32, i32
  }
  func.func @transform_1(%arg0: i32) -> (i32, i32, i32) {
    %c0_i32 = arith.constant 0 : i32
    %c0_i32_0 = arith.constant 0 : i32
    %c0_i32_1 = arith.constant 0 : i32
    %c0_i32_2 = arith.constant 0 : i32
    return %c0_i32, %c0_i32_0, %c0_i32_1 : i32, i32, i32
  }
  func.func @transform_2(%arg0: i32) -> (i32, i32) {
    %c0_i32 = arith.constant 0 : i32
    %c0_i32_0 = arith.constant 0 : i32
    %c0_i32_1 = arith.constant 0 : i32
    return %c0_i32, %c0_i32_0 : i32, i32
  }
  func.func @transform_3(%arg0: i32) -> (i32, i32, i32) {
    %c0_i32 = arith.constant 0 : i32
    %c0_i32_0 = arith.constant 0 : i32
    %c0_i32_1 = arith.constant 0 : i32
    %c0_i32_2 = arith.constant 0 : i32
    return %c0_i32, %c0_i32_0, %c0_i32_1 : i32, i32, i32
  }
  func.func @transform_4(%arg0: i32) -> (i32, i32) {
    %c0_i32 = arith.constant 0 : i32
    %c0_i32_0 = arith.constant 0 : i32
    %c0_i32_1 = arith.constant 0 : i32
    return %c0_i32, %c0_i32_0 : i32, i32
  }
  func.func @transform_5(%arg0: i32) -> (i32, i32, i32) {
    %c0_i32 = arith.constant 0 : i32
    %c0_i32_0 = arith.constant 0 : i32
    %c0_i32_1 = arith.constant 0 : i32
    %c0_i32_2 = arith.constant 0 : i32
    return %c0_i32, %c0_i32_0, %c0_i32_1 : i32, i32, i32
  }
  func.func @transform_6(%arg0: i32) -> (i32, i32) {
    %c0_i32 = arith.constant 0 : i32
    %c0_i32_0 = arith.constant 0 : i32
    %c0_i32_1 = arith.constant 0 : i32
    return %c0_i32, %c0_i32_0 : i32, i32
  }
  func.func @transform_7(%arg0: i32) -> (i32, i32) {
    %c0_i32 = arith.constant 0 : i32
    %c0_i32_0 = arith.constant 0 : i32
    %c0_i32_1 = arith.constant 0 : i32
    return %c0_i32, %c0_i32_0 : i32, i32
  }
  func.func @transform_8(%arg0: i32) -> (i32, i32) {
    %c0_i32 = arith.constant 0 : i32
    %c0_i32_0 = arith.constant 0 : i32
    %c0_i32_1 = arith.constant 0 : i32
    return %c0_i32, %c0_i32_0 : i32, i32
  }
  func.func @transform_9(%arg0: i32) -> (i32, i32) {
    %c0_i32 = arith.constant 0 : i32
    %c0_i32_0 = arith.constant 0 : i32
    return %arg0, %c0_i32 : i32, i32
  }
}

</mosaic_0001>

<llo_original>
// kernel: temp_conv_forward.1
$region0: #{temp_conv_forward.1}
  #allocation0 [shape = 'u32[]', space=smem, size = 0x4, offset = 0x4, fixed_abs, tag = 'smem constant byte address 0x4 - core index']
  #allocation1 [shape = 'u32[144,128]{1,0:T(1,128)}', space=vmem, size = 0x12000, scoped, tag = 'internal scratch']
  %s0 = inlined_call_operand.vmem [shape: bf16[16,8], index: 0, kind: input, shape index: {}]
  %s1 = inlined_call_operand.vmem [shape: bf16[3,8,16], index: 1, kind: input, shape index: {}]
  %s2 = inlined_call_operand.vmem [shape: f32[1,16], index: 2, kind: input, shape index: {}]
  %s3 = inlined_call_operand.vmem [shape: bf16[3,16,16], index: 3, kind: input, shape index: {}]
  %s4 = inlined_call_operand.vmem [shape: f32[1,16], index: 4, kind: input, shape index: {}]
  %s5 = inlined_call_operand.vmem [shape: bf16[8,16,32], index: 5, kind: input, shape index: {}]
  %s6 = inlined_call_operand.vmem [shape: f32[1,32], index: 6, kind: input, shape index: {}]
  %s7 = inlined_call_operand.vmem [shape: bf16[32,8], index: 7, kind: input, shape index: {}]
  %s8 = inlined_call_operand.vmem [shape: f32[1,8], index: 8, kind: input, shape index: {}]
  %s9 = inlined_call_operand.hbm [shape: f32[2,8], index: 9, kind: output, shape index: {}]
  %s10 = sld [smem:[#allocation0]]
  $region46: #{temp_conv_forward.1} parent=0
    _
  %s12 = ssub.s32 1, %s10
  %s13 = scalar_select 0, %s12, %s10
  $region1: #{temp_conv_forward.1} parent=0
    #allocation2 [shape = 'u8[1024]{0}', space=vmem, size = 0x400, scoped, tag = 'output window, operand 0, single buffered']
    #allocation3 [shape = 's32[1]{0}', space=sflag, size = 0x4, scoped, tag = 'scoped memory for temp_conv_forward.1']
    %14 = vsyncpa [#allocation3], 0
    // Predicated region
    $region2: #{temp_conv_forward.1} parent=1 // pred_check
      _
    $region3: #{temp_conv_forward.1} parent=1 // pred_check_branch
      %16 = sbr.rel (0) target = $region5
    $region4: #{temp_conv_forward.1} parent=1 // pred_region
      _
    $region5: #{temp_conv_forward.1} parent=1 // pred_fallthru
      _
    // Predicated region
    $region6: #{temp_conv_forward.1} parent=1 // pred_check
      _
    $region7: #{temp_conv_forward.1} parent=1 // pred_check_branch
      %18 = sbr.rel (0) target = $region9
    $region8: #{temp_conv_forward.1} parent=1 // pred_region
      _
    $region9: #{temp_conv_forward.1} parent=1 // pred_fallthru
      _
    // Predicated region
    $region10: #{temp_conv_forward.1} parent=1 // pred_check
      _
    $region11: #{temp_conv_forward.1} parent=1 // pred_check_branch
      %20 = sbr.rel (0) target = $region13
    $region12: #{temp_conv_forward.1} parent=1 // pred_region
      _
    $region13: #{temp_conv_forward.1} parent=1 // pred_fallthru
      _
    // Predicated region
    $region14: #{temp_conv_forward.1} parent=1 // pred_check
      _
    $region15: #{temp_conv_forward.1} parent=1 // pred_check_branch
      %22 = sbr.rel (0) target = $region17
    $region16: #{temp_conv_forward.1} parent=1 // pred_region
      _
    $region17: #{temp_conv_forward.1} parent=1 // pred_fallthru
      _
    // Predicated region
    $region18: #{temp_conv_forward.1} parent=1 // pred_check
      _
    $region19: #{temp_conv_forward.1} parent=1 // pred_check_branch
      %24 = sbr.rel (0) target = $region21
    $region20: #{temp_conv_forward.1} parent=1 // pred_region
      _
    $region21: #{temp_conv_forward.1} parent=1 // pred_fallthru
      _
    // Predicated region
    $region22: #{temp_conv_forward.1} parent=1 // pred_check
      _
    $region23: #{temp_conv_forward.1} parent=1 // pred_check_branch
      %26 = sbr.rel (0) target = $region25
    $region24: #{temp_conv_forward.1} parent=1 // pred_region
      _
    $region25: #{temp_conv_forward.1} parent=1 // pred_fallthru
      _
    // Predicated region
    $region26: #{temp_conv_forward.1} parent=1 // pred_check
      _
    $region27: #{temp_conv_forward.1} parent=1 // pred_check_branch
      %28 = sbr.rel (0) target = $region29
    $region28: #{temp_conv_forward.1} parent=1 // pred_region
      _
    $region29: #{temp_conv_forward.1} parent=1 // pred_fallthru
      _
    // Predicated region
    $region30: #{temp_conv_forward.1} parent=1 // pred_check
      _
    $region31: #{temp_conv_forward.1} parent=1 // pred_check_branch
      %30 = sbr.rel (0) target = $region33
    $region32: #{temp_conv_forward.1} parent=1 // pred_region
      _
    $region33: #{temp_conv_forward.1} parent=1 // pred_fallthru
      _
    // Predicated region
    $region34: #{temp_conv_forward.1} parent=1 // pred_check
      _
    $region35: #{temp_conv_forward.1} parent=1 // pred_check_branch
      %32 = sbr.rel (0) target = $region37
    $region36: #{temp_conv_forward.1} parent=1 // pred_region
      _
    $region37: #{temp_conv_forward.1} parent=1 // pred_fallthru
      _
    %v34 = vld [vmem:[%s0] sm:$0xf]
    %v35 = vld [vmem:[%s0 + $0x4] sm:$0xf]
    %v36 = vunpack.c.l.bf16 %v34
    %v37 = vunpack.c.l.bf16 %v35
    %v38 = vlaneseq
    %v39 = vshrl.u32 %v38, 7
    %v40 = vadd.s32 %v39, 8
    %vm41 = vcmp.lt.s32.totalorder %v39, 0
    %v42 = vsub.s32 0, %v39
    %v43 = vsel %vm41, %v42, %v39
    %v44 = vshrl.u32 %v43, 3
    %v45 = vand.u32 %v43, 7
    %v46 = vsub.s32 0, %v45
    %v47 = vsel %vm41, %v46, %v45
    %vm48 = vcmp.lt.s32.totalorder %v40, 0
    %v49 = vsub.s32 0, %v40
    %v50 = vsel %vm48, %v49, %v40
    %v51 = vshrl.u32 %v50, 3
    %v52 = vand.u32 %v50, 7
    %v53 = vsub.s32 0, %v52
    %v54 = vsel %vm48, %v53, %v52
    %vm55 = vcmp.ne.s32.totalorder %v47, 0
    %vm56 = vcmp.ne.s32.totalorder %v54, 0
    %vm57 = vcmp.lt.s32.totalorder %v47, 0
    %vm58 = vcmp.lt.s32.totalorder %v54, 0
    %vm59 = vmand %vm57, %vm55
    %vm60 = vmand %vm58, %vm56
    %v61 = vadd.s32 %v47, 8
    %v62 = vadd.s32 %v54, 8
    %v63 = vsel %vm59, %v61, %v47
    %v64 = vsel %vm60, %v62, %v54
    %vm65 = vcmp.ne.s32.totalorder %v63, 0
    %vm66 = vcmp.ne.s32.totalorder %v64, 0
    %vm67 = vcmp.ne.s32.totalorder %v63, 7
    %vm68 = vcmp.ne.s32.totalorder %v64, 7
    %v69 = vsel %vm65, 1, 0
    %v70 = vsel %vm66, 1, 0
    %vm71 = vcmp.eq.s32.totalorder %v69, 1
    %vm72 = vcmp.eq.s32.totalorder %v70, 1
    %v73 = vsel %vm67, 1, 0
    %v74 = vsel %vm68, 1, 0
    %vm75 = vcmp.eq.s32.totalorder %v73, 1
    %vm76 = vcmp.eq.s32.totalorder %v74, 1
    %v77 = vld [vmem:[%s2] sm:$0x1]
    %v78 = vrot.slane %v36, 7
    %v79 = vrot.slane %v37, 7
    %vm80 = vcmp.lt.s32.totalorder %v39, 1
    %v81 = vsel %vm80, %v78, %v79
    %v82 = vsel %vm80, %v79, %v78
    %v83 = vsel %vm71, %v82, 0.0
    %v84 = vsel %vm72, %v81, 0.0
    %v85 = vrot.slane %v36, 1
    %v86 = vrot.slane %v37, 1
    %vm87 = vcmp.lt.s32.totalorder %v39, 7
    %v88 = vsel %vm87, %v85, %v86
    %v89 = vsel %vm87, %v86, %v85
    %v90 = vsel %vm75, %v88, 0.0
    %v91 = vsel %vm76, %v89, 0.0
    %v92 = vpack.c.bf16 %v84, %v83
    %v93 = vld [vmem:[%s1] sm:$0xf]
    %s94 = scalar_lea.vmem %s1, 4
    %v95 = vld [vmem:[%s94] sm:$0xf]
    %v98 = vunpack.c.l.b16 %v34
    %v99 = vunpack.c.l.b16 %v35
    %v100 = vpack.c.b16 %v99, %v98
    %vm101 = vcmask 64512
    %v103 = vsel %vm101, %v100, 0
    %vm105 = vcmask 1043456
    %v107 = vsel %vm105, %v95, 0
    %109 = vmatprep.subr.bf16.mxu0 0
    %110 = vmatpush1.bf16.msra.mxu0 %v107
    %111 = vmatprep.subr.bf16.mxu0 0
    %112 = vmatpush1.bf16.msra.mxu0 0
    %113 = vmatprep.subr.bf16.mxu0 0
    %114 = vmatpush1.bf16.msra.mxu0 0
    %115 = vmatprep.subr.bf16.mxu0 0
    %116 = vmatpush1.bf16.msra.mxu0 0
    %117 = vmatprep.subr.bf16.mxu0 0
    %118 = vmatpush1.bf16.msra.mxu0 0
    %119 = vmatprep.subr.bf16.mxu0 0
    %120 = vmatpush1.bf16.msra.mxu0 0
    %121 = vmatprep.subr.bf16.mxu0 0
    %122 = vmatpush1.bf16.msra.mxu0 0
    %123 = vmatprep.subr.bf16.mxu0 0
    %124 = vmatpush1.bf16.msra.mxu0 0
    %125 = vmatprep.subr.bf16.mxu0 0
    %126 = vmatpush1.bf16.msra.mxu0 0
    %127 = vmatprep.subr.bf16.mxu0 0
    %128 = vmatpush1.bf16.msra.mxu0 0
    %129 = vmatprep.subr.bf16.mxu0 0
    %130 = vmatpush1.bf16.msra.mxu0 0
    %131 = vmatprep.subr.bf16.mxu0 0
    %132 = vmatpush1.bf16.msra.mxu0 0
    %133 = vmatprep.subr.bf16.mxu0 0
    %134 = vmatpush1.bf16.msra.mxu0 0
    %135 = vmatprep.subr.bf16.mxu0 0
    %136 = vmatpush1.bf16.msra.mxu0 0
    %137 = vmatprep.subr.bf16.mxu0 0
    %138 = vmatpush1.bf16.msra.mxu0 0
    %139 = vmatprep.subr.bf16.mxu0 0
    %140 = vmatpush1.bf16.msra.mxu0 0
    %141 = vmatprep.mubr.bf16.mxu0 0
    %142 = vmatmul.mubr.bf16.gmra.mrb[0].mxu0 %v103
    %v143 = vpop.f32.mrb[0].mxu0
    %v144 = vadd.f32 0.0, %v143
    %v145 = vpop.f32.mrb[0].mxu0
    %v146 = vpop.f32.mrb[0].mxu0
    %v147 = vadd.f32 0.0, %v146
    %v148 = vpop.f32.mrb[0].mxu0
    %149 = vdwg.mxu0
    %v151 = vsel %vm101, %v92, 0
    %v154 = vsel %vm105, %v93, 0
    %156 = vmatprep.subr.bf16.mxu0 0
    %157 = vmatpush1.bf16.msra.mxu0 %v154
    %158 = vmatprep.subr.bf16.mxu0 0
    %159 = vmatpush1.bf16.msra.mxu0 0
    %160 = vmatprep.subr.bf16.mxu0 0
    %161 = vmatpush1.bf16.msra.mxu0 0
    %162 = vmatprep.subr.bf16.mxu0 0
    %163 = vmatpush1.bf16.msra.mxu0 0
    %164 = vmatprep.subr.bf16.mxu0 0
    %165 = vmatpush1.bf16.msra.mxu0 0
    %166 = vmatprep.subr.bf16.mxu0 0
    %167 = vmatpush1.bf16.msra.mxu0 0
    %168 = vmatprep.subr.bf16.mxu0 0
    %169 = vmatpush1.bf16.msra.mxu0 0
    %170 = vmatprep.subr.bf16.mxu0 0
    %171 = vmatpush1.bf16.msra.mxu0 0
    %172 = vmatprep.subr.bf16.mxu0 0
    %173 = vmatpush1.bf16.msra.mxu0 0
    %174 = vmatprep.subr.bf16.mxu0 0
    %175 = vmatpush1.bf16.msra.mxu0 0
    %176 = vmatprep.subr.bf16.mxu0 0
    %177 = vmatpush1.bf16.msra.mxu0 0
    %178 = vmatprep.subr.bf16.mxu0 0
    %179 = vmatpush1.bf16.msra.mxu0 0
    %180 = vmatprep.subr.bf16.mxu0 0
    %181 = vmatpush1.bf16.msra.mxu0 0
    %182 = vmatprep.subr.bf16.mxu0 0
    %183 = vmatpush1.bf16.msra.mxu0 0
    %184 = vmatprep.subr.bf16.mxu0 0
    %185 = vmatpush1.bf16.msra.mxu0 0
    %186 = vmatprep.subr.bf16.mxu0 0
    %187 = vmatpush1.bf16.msra.mxu0 0
    %188 = vmatprep.mubr.bf16.mxu0 0
    %189 = vmatmul.mubr.bf16.gmra.mrb[0].mxu0 %v151
    %v190 = vpop.f32.mrb[0].mxu0
    %v191 = vadd.f32 %v144, %v190
    %v192 = vpop.f32.mrb[0].mxu0
    %v193 = vpop.f32.mrb[0].mxu0
    %v194 = vadd.f32 %v147, %v193
    %v195 = vpop.f32.mrb[0].mxu0
    %196 = vdwg.mxu0
    %v197 = vpack.c.bf16 %v91, %v90
    %s198 = scalar_lea.vmem %s1, 8
    %v199 = vld [vmem:[%s198] sm:$0xf]
    %v201 = vsel %vm101, %v197, 0
    %v204 = vsel %vm105, %v199, 0
    %206 = vmatprep.subr.bf16.mxu0 0
    %207 = vmatpush1.bf16.msra.mxu0 %v204
    %208 = vmatprep.subr.bf16.mxu0 0
    %209 = vmatpush1.bf16.msra.mxu0 0
    %210 = vmatprep.subr.bf16.mxu0 0
    %211 = vmatpush1.bf16.msra.mxu0 0
    %212 = vmatprep.subr.bf16.mxu0 0
    %213 = vmatpush1.bf16.msra.mxu0 0
    %214 = vmatprep.subr.bf16.mxu0 0
    %215 = vmatpush1.bf16.msra.mxu0 0
    %216 = vmatprep.subr.bf16.mxu0 0
    %217 = vmatpush1.bf16.msra.mxu0 0
    %218 = vmatprep.subr.bf16.mxu0 0
    %219 = vmatpush1.bf16.msra.mxu0 0
    %220 = vmatprep.subr.bf16.mxu0 0
    %221 = vmatpush1.bf16.msra.mxu0 0
    %222 = vmatprep.subr.bf16.mxu0 0
    %223 = vmatpush1.bf16.msra.mxu0 0
    %224 = vmatprep.subr.bf16.mxu0 0
    %225 = vmatpush1.bf16.msra.mxu0 0
    %226 = vmatprep.subr.bf16.mxu0 0
    %227 = vmatpush1.bf16.msra.mxu0 0
    %228 = vmatprep.subr.bf16.mxu0 0
    %229 = vmatpush1.bf16.msra.mxu0 0
    %230 = vmatprep.subr.bf16.mxu0 0
    %231 = vmatpush1.bf16.msra.mxu0 0
    %232 = vmatprep.subr.bf16.mxu0 0
    %233 = vmatpush1.bf16.msra.mxu0 0
    %234 = vmatprep.subr.bf16.mxu0 0
    %235 = vmatpush1.bf16.msra.mxu0 0
    %236 = vmatprep.subr.bf16.mxu0 0
    %237 = vmatpush1.bf16.msra.mxu0 0
    %238 = vmatprep.mubr.bf16.mxu0 0
    %239 = vmatmul.mubr.bf16.gmra.mrb[0].mxu0 %v201
    %v240 = vpop.f32.mrb[0].mxu0
    %v241 = vadd.f32 0.0, %v240
    %v242 = vpop.f32.mrb[0].mxu0
    %v243 = vpop.f32.mrb[0].mxu0
    %v244 = vadd.f32 0.0, %v243
    %v245 = vpop.f32.mrb[0].mxu0
    %246 = vdwg.mxu0
    %v247 = vadd.f32 %v191, %v241
    %v248 = vadd.f32 %v194, %v244
    %v250 = vlaneseq
    %v251 = vshrl.u32 %v250, 7
    %v252 = vsub.s32 0, %v251
    %v253 = vrot.slane %v77, %v252
    %v255 = vadd.f32 %v247, %v253
    %v256 = vadd.f32 %v248, %v253
    %v257 = vmax.f32 %v255, 0.0
    %v258 = vmax.f32 %v256, 0.0
    %v259 = vld [vmem:[%s4] sm:$0x1]
    %v260 = vrot.slane %v257, 7
    %v261 = vrot.slane %v258, 7
    %v262 = vsel %vm80, %v260, %v261
    %v263 = vsel %vm80, %v261, %v260
    %v264 = vsel %vm71, %v263, 0.0
    %v265 = vsel %vm72, %v262, 0.0
    %v266 = vrot.slane %v257, 1
    %v267 = vrot.slane %v258, 1
    %v268 = vsel %vm87, %v266, %v267
    %v269 = vsel %vm87, %v267, %v266
    %v270 = vsel %vm75, %v268, 0.0
    %v271 = vsel %vm76, %v269, 0.0
    %v272 = vpack.c.bf16 %v265, %v264
    %v273 = vld [vmem:[%s3] sm:$0xf]
    %v274 = vld [vmem:[%s3 + $0x4] sm:$0xf]
    %v275 = vpack.c.bf16 %v258, %v257
    %s276 = scalar_lea.vmem %s3, 8
    %v277 = vld [vmem:[%s276] sm:$0xf]
    %v278 = vld [vmem:[%s276 + $0x4] sm:$0xf]
    %v281 = vunpack.c.l.b16 %v277
    %v282 = vunpack.c.l.b16 %v278
    %v283 = vpack.c.b16 %v282, %v281
    %vm285 = vcmask 130048
    %v287 = vsel %vm285, %v275, 0
    %289 = vmatprep.subr.bf16.mxu0 0
    %290 = vmatpush1.bf16.msra.mxu0 %v283
    %291 = vmatprep.subr.bf16.mxu0 0
    %292 = vmatpush1.bf16.msra.mxu0 0
    %293 = vmatprep.subr.bf16.mxu0 0
    %294 = vmatpush1.bf16.msra.mxu0 0
    %295 = vmatprep.subr.bf16.mxu0 0
    %296 = vmatpush1.bf16.msra.mxu0 0
    %297 = vmatprep.subr.bf16.mxu0 0
    %298 = vmatpush1.bf16.msra.mxu0 0
    %299 = vmatprep.subr.bf16.mxu0 0
    %300 = vmatpush1.bf16.msra.mxu0 0
    %301 = vmatprep.subr.bf16.mxu0 0
    %302 = vmatpush1.bf16.msra.mxu0 0
    %303 = vmatprep.subr.bf16.mxu0 0
    %304 = vmatpush1.bf16.msra.mxu0 0
    %305 = vmatprep.subr.bf16.mxu0 0
    %306 = vmatpush1.bf16.msra.mxu0 0
    %307 = vmatprep.subr.bf16.mxu0 0
    %308 = vmatpush1.bf16.msra.mxu0 0
    %309 = vmatprep.subr.bf16.mxu0 0
    %310 = vmatpush1.bf16.msra.mxu0 0
    %311 = vmatprep.subr.bf16.mxu0 0
    %312 = vmatpush1.bf16.msra.mxu0 0
    %313 = vmatprep.subr.bf16.mxu0 0
    %314 = vmatpush1.bf16.msra.mxu0 0
    %315 = vmatprep.subr.bf16.mxu0 0
    %316 = vmatpush1.bf16.msra.mxu0 0
    %317 = vmatprep.subr.bf16.mxu0 0
    %318 = vmatpush1.bf16.msra.mxu0 0
    %319 = vmatprep.subr.bf16.mxu0 0
    %320 = vmatpush1.bf16.msra.mxu0 0
    %321 = vmatprep.mubr.bf16.mxu0 0
    %322 = vmatmul.mubr.bf16.gmra.mrb[0].mxu0 %v287
    %v323 = vpop.f32.mrb[0].mxu0
    %v324 = vadd.f32 0.0, %v323
    %v325 = vpop.f32.mrb[0].mxu0
    %v326 = vpop.f32.mrb[0].mxu0
    %v327 = vadd.f32 0.0, %v326
    %v328 = vpop.f32.mrb[0].mxu0
    %329 = vdwg.mxu0
    %v332 = vunpack.c.l.b16 %v273
    %v333 = vunpack.c.l.b16 %v274
    %v334 = vpack.c.b16 %v333, %v332
    %v337 = vsel %vm285, %v272, 0
    %339 = vmatprep.subr.bf16.mxu0 0
    %340 = vmatpush1.bf16.msra.mxu0 %v334
    %341 = vmatprep.subr.bf16.mxu0 0
    %342 = vmatpush1.bf16.msra.mxu0 0
    %343 = vmatprep.subr.bf16.mxu0 0
    %344 = vmatpush1.bf16.msra.mxu0 0
    %345 = vmatprep.subr.bf16.mxu0 0
    %346 = vmatpush1.bf16.msra.mxu0 0
    %347 = vmatprep.subr.bf16.mxu0 0
    %348 = vmatpush1.bf16.msra.mxu0 0
    %349 = vmatprep.subr.bf16.mxu0 0
    %350 = vmatpush1.bf16.msra.mxu0 0
    %351 = vmatprep.subr.bf16.mxu0 0
    %352 = vmatpush1.bf16.msra.mxu0 0
    %353 = vmatprep.subr.bf16.mxu0 0
    %354 = vmatpush1.bf16.msra.mxu0 0
    %355 = vmatprep.subr.bf16.mxu0 0
    %356 = vmatpush1.bf16.msra.mxu0 0
    %357 = vmatprep.subr.bf16.mxu0 0
    %358 = vmatpush1.bf16.msra.mxu0 0
    %359 = vmatprep.subr.bf16.mxu0 0
    %360 = vmatpush1.bf16.msra.mxu0 0
    %361 = vmatprep.subr.bf16.mxu0 0
    %362 = vmatpush1.bf16.msra.mxu0 0
    %363 = vmatprep.subr.bf16.mxu0 0
    %364 = vmatpush1.bf16.msra.mxu0 0
    %365 = vmatprep.subr.bf16.mxu0 0
    %366 = vmatpush1.bf16.msra.mxu0 0
    %367 = vmatprep.subr.bf16.mxu0 0
    %368 = vmatpush1.bf16.msra.mxu0 0
    %369 = vmatprep.subr.bf16.mxu0 0
    %370 = vmatpush1.bf16.msra.mxu0 0
    %371 = vmatprep.mubr.bf16.mxu0 0
    %372 = vmatmul.mubr.bf16.gmra.mrb[0].mxu0 %v337
    %v373 = vpop.f32.mrb[0].mxu0
    %v374 = vadd.f32 %v324, %v373
    %v375 = vpop.f32.mrb[0].mxu0
    %v376 = vpop.f32.mrb[0].mxu0
    %v377 = vadd.f32 %v327, %v376
    %v378 = vpop.f32.mrb[0].mxu0
    %379 = vdwg.mxu0
    %v380 = vpack.c.bf16 %v271, %v270
    %s381 = scalar_lea.vmem %s3, 16
    %v382 = vld [vmem:[%s381] sm:$0xf]
    %v383 = vld [vmem:[%s381 + $0x4] sm:$0xf]
    %v386 = vunpack.c.l.b16 %v382
    %v387 = vunpack.c.l.b16 %v383
    %v388 = vpack.c.b16 %v387, %v386
    %v391 = vsel %vm285, %v380, 0
    %393 = vmatprep.subr.bf16.mxu0 0
    %394 = vmatpush1.bf16.msra.mxu0 %v388
    %395 = vmatprep.subr.bf16.mxu0 0
    %396 = vmatpush1.bf16.msra.mxu0 0
    %397 = vmatprep.subr.bf16.mxu0 0
    %398 = vmatpush1.bf16.msra.mxu0 0
    %399 = vmatprep.subr.bf16.mxu0 0
    %400 = vmatpush1.bf16.msra.mxu0 0
    %401 = vmatprep.subr.bf16.mxu0 0
    %402 = vmatpush1.bf16.msra.mxu0 0
    %403 = vmatprep.subr.bf16.mxu0 0
    %404 = vmatpush1.bf16.msra.mxu0 0
    %405 = vmatprep.subr.bf16.mxu0 0
    %406 = vmatpush1.bf16.msra.mxu0 0
    %407 = vmatprep.subr.bf16.mxu0 0
    %408 = vmatpush1.bf16.msra.mxu0 0
    %409 = vmatprep.subr.bf16.mxu0 0
    %410 = vmatpush1.bf16.msra.mxu0 0
    %411 = vmatprep.subr.bf16.mxu0 0
    %412 = vmatpush1.bf16.msra.mxu0 0
    %413 = vmatprep.subr.bf16.mxu0 0
    %414 = vmatpush1.bf16.msra.mxu0 0
    %415 = vmatprep.subr.bf16.mxu0 0
    %416 = vmatpush1.bf16.msra.mxu0 0
    %417 = vmatprep.subr.bf16.mxu0 0
    %418 = vmatpush1.bf16.msra.mxu0 0
    %419 = vmatprep.subr.bf16.mxu0 0
    %420 = vmatpush1.bf16.msra.mxu0 0
    %421 = vmatprep.subr.bf16.mxu0 0
    %422 = vmatpush1.bf16.msra.mxu0 0
    %423 = vmatprep.subr.bf16.mxu0 0
    %424 = vmatpush1.bf16.msra.mxu0 0
    %425 = vmatprep.mubr.bf16.mxu0 0
    %426 = vmatmul.mubr.bf16.gmra.mrb[0].mxu0 %v391
    %v427 = vpop.f32.mrb[0].mxu0
    %v428 = vadd.f32 0.0, %v427
    %v429 = vpop.f32.mrb[0].mxu0
    %v430 = vpop.f32.mrb[0].mxu0
    %v431 = vadd.f32 0.0, %v430
    %v432 = vpop.f32.mrb[0].mxu0
    %433 = vdwg.mxu0
    %v434 = vadd.f32 %v374, %v428
    %v435 = vadd.f32 %v377, %v431
    %v437 = vlaneseq
    %v438 = vshrl.u32 %v437, 7
    %v439 = vsub.s32 0, %v438
    %v440 = vrot.slane %v259, %v439
    %v442 = vadd.f32 %v434, %v440
    %v443 = vadd.f32 %v435, %v440
    %v444 = vmax.f32 %v442, 0.0
    %v445 = vmax.f32 %v443, 0.0
    %v446 = vpack.c.bf16 %v444, %v444
    %v447 = vpack.c.bf16 %v445, %v445
    %v448 = vld [vmem:[%s5] sm:$0xf]
    %v449 = vld [vmem:[%s5 + $0x4] sm:$0xf]
    %s450 = scalar_lea.vmem %s5, 8
    %v451 = vld [vmem:[%s450] sm:$0xf]
    %v452 = vld [vmem:[%s450 + $0x4] sm:$0xf]
    %v455 = vunpack.c.l.b16 %v446
    %v456 = vunpack.c.l.b16 %v447
    %v457 = vrot.slane %v455, 1
    %vm458 = vcmask 1041409
    %v459 = vsel %vm458, %v456, %v457
    %v460 = vpack.c.b16 %v459, %v459
    %v463 = vunpack.c.l.b16 %v451
    %v464 = vunpack.c.l.b16 %v452
    %v465 = vpack.c.b16 %v464, %v463
    %v468 = vsel %vm285, %v460, 0
    %470 = vmatprep.subr.bf16.mxu0 0
    %471 = vmatpush1.bf16.msra.mxu0 %v465
    %472 = vmatprep.subr.bf16.mxu0 0
    %473 = vmatpush1.bf16.msra.mxu0 0
    %474 = vmatprep.subr.bf16.mxu0 0
    %475 = vmatpush1.bf16.msra.mxu0 0
    %476 = vmatprep.subr.bf16.mxu0 0
    %477 = vmatpush1.bf16.msra.mxu0 0
    %478 = vmatprep.subr.bf16.mxu0 0
    %479 = vmatpush1.bf16.msra.mxu0 0
    %480 = vmatprep.subr.bf16.mxu0 0
    %481 = vmatpush1.bf16.msra.mxu0 0
    %482 = vmatprep.subr.bf16.mxu0 0
    %483 = vmatpush1.bf16.msra.mxu0 0
    %484 = vmatprep.subr.bf16.mxu0 0
    %485 = vmatpush1.bf16.msra.mxu0 0
    %486 = vmatprep.subr.bf16.mxu0 0
    %487 = vmatpush1.bf16.msra.mxu0 0
    %488 = vmatprep.subr.bf16.mxu0 0
    %489 = vmatpush1.bf16.msra.mxu0 0
    %490 = vmatprep.subr.bf16.mxu0 0
    %491 = vmatpush1.bf16.msra.mxu0 0
    %492 = vmatprep.subr.bf16.mxu0 0
    %493 = vmatpush1.bf16.msra.mxu0 0
    %494 = vmatprep.subr.bf16.mxu0 0
    %495 = vmatpush1.bf16.msra.mxu0 0
    %496 = vmatprep.subr.bf16.mxu0 0
    %497 = vmatpush1.bf16.msra.mxu0 0
    %498 = vmatprep.subr.bf16.mxu0 0
    %499 = vmatpush1.bf16.msra.mxu0 0
    %500 = vmatprep.subr.bf16.mxu0 0
    %501 = vmatpush1.bf16.msra.mxu0 0
    %502 = vmatprep.mubr.bf16.mxu0 0
    %503 = vmatmul.mubr.bf16.gmra.mrb[0].mxu0 %v468
    %v504 = vpop.f32.mrb[0].mxu0
    %v505 = vadd.f32 0.0, %v504
    %v506 = vpop.f32.mrb[0].mxu0
    %v507 = vpop.f32.mrb[0].mxu0
    %v508 = vpop.f32.mrb[0].mxu0
    %509 = vdwg.mxu0
    %v510 = vrot.slane %v456, 7
    %v511 = vsel %vm458, %v510, %v455
    %v512 = vpack.c.b16 %v511, %v511
    %v515 = vunpack.c.l.b16 %v448
    %v516 = vunpack.c.l.b16 %v449
    %v517 = vpack.c.b16 %v516, %v515
    %v520 = vsel %vm285, %v512, 0
    %522 = vmatprep.subr.bf16.mxu0 0
    %523 = vmatpush1.bf16.msra.mxu0 %v517
    %524 = vmatprep.subr.bf16.mxu0 0
    %525 = vmatpush1.bf16.msra.mxu0 0
    %526 = vmatprep.subr.bf16.mxu0 0
    %527 = vmatpush1.bf16.msra.mxu0 0
    %528 = vmatprep.subr.bf16.mxu0 0
    %529 = vmatpush1.bf16.msra.mxu0 0
    %530 = vmatprep.subr.bf16.mxu0 0
    %531 = vmatpush1.bf16.msra.mxu0 0
    %532 = vmatprep.subr.bf16.mxu0 0
    %533 = vmatpush1.bf16.msra.mxu0 0
    %534 = vmatprep.subr.bf16.mxu0 0
    %535 = vmatpush1.bf16.msra.mxu0 0
    %536 = vmatprep.subr.bf16.mxu0 0
    %537 = vmatpush1.bf16.msra.mxu0 0
    %538 = vmatprep.subr.bf16.mxu0 0
    %539 = vmatpush1.bf16.msra.mxu0 0
    %540 = vmatprep.subr.bf16.mxu0 0
    %541 = vmatpush1.bf16.msra.mxu0 0
    %542 = vmatprep.subr.bf16.mxu0 0
    %543 = vmatpush1.bf16.msra.mxu0 0
    %544 = vmatprep.subr.bf16.mxu0 0
    %545 = vmatpush1.bf16.msra.mxu0 0
    %546 = vmatprep.subr.bf16.mxu0 0
    %547 = vmatpush1.bf16.msra.mxu0 0
    %548 = vmatprep.subr.bf16.mxu0 0
    %549 = vmatpush1.bf16.msra.mxu0 0
    %550 = vmatprep.subr.bf16.mxu0 0
    %551 = vmatpush1.bf16.msra.mxu0 0
    %552 = vmatprep.subr.bf16.mxu0 0
    %553 = vmatpush1.bf16.msra.mxu0 0
    %554 = vmatprep.mubr.bf16.mxu0 0
    %555 = vmatmul.mubr.bf16.gmra.mrb[0].mxu0 %v520
    %v556 = vpop.f32.mrb[0].mxu0
    %v557 = vadd.f32 %v505, %v556
    %v558 = vpop.f32.mrb[0].mxu0
    %v559 = vpop.f32.mrb[0].mxu0
    %v560 = vpop.f32.mrb[0].mxu0
    %561 = vdwg.mxu0
    %s562 = scalar_lea.vmem %s5, 16
    %v563 = vld [vmem:[%s562] sm:$0xf]
    %v564 = vld [vmem:[%s562 + $0x4] sm:$0xf]
    %v565 = vrot.slane %v455, 2
    %v566 = vrot.slane %v456, 1
    %v567 = vsel %vm458, %v566, %v565
    %v568 = vpack.c.b16 %v567, %v567
    %v571 = vunpack.c.l.b16 %v563
    %v572 = vunpack.c.l.b16 %v564
    %v573 = vpack.c.b16 %v572, %v571
    %v576 = vsel %vm285, %v568, 0
    %578 = vmatprep.subr.bf16.mxu0 0
    %579 = vmatpush1.bf16.msra.mxu0 %v573
    %580 = vmatprep.subr.bf16.mxu0 0
    %581 = vmatpush1.bf16.msra.mxu0 0
    %582 = vmatprep.subr.bf16.mxu0 0
    %583 = vmatpush1.bf16.msra.mxu0 0
    %584 = vmatprep.subr.bf16.mxu0 0
    %585 = vmatpush1.bf16.msra.mxu0 0
    %586 = vmatprep.subr.bf16.mxu0 0
    %587 = vmatpush1.bf16.msra.mxu0 0
    %588 = vmatprep.subr.bf16.mxu0 0
    %589 = vmatpush1.bf16.msra.mxu0 0
    %590 = vmatprep.subr.bf16.mxu0 0
    %591 = vmatpush1.bf16.msra.mxu0 0
    %592 = vmatprep.subr.bf16.mxu0 0
    %593 = vmatpush1.bf16.msra.mxu0 0
    %594 = vmatprep.subr.bf16.mxu0 0
    %595 = vmatpush1.bf16.msra.mxu0 0
    %596 = vmatprep.subr.bf16.mxu0 0
    %597 = vmatpush1.bf16.msra.mxu0 0
    %598 = vmatprep.subr.bf16.mxu0 0
    %599 = vmatpush1.bf16.msra.mxu0 0
    %600 = vmatprep.subr.bf16.mxu0 0
    %601 = vmatpush1.bf16.msra.mxu0 0
    %602 = vmatprep.subr.bf16.mxu0 0
    %603 = vmatpush1.bf16.msra.mxu0 0
    %604 = vmatprep.subr.bf16.mxu0 0
    %605 = vmatpush1.bf16.msra.mxu0 0
    %606 = vmatprep.subr.bf16.mxu0 0
    %607 = vmatpush1.bf16.msra.mxu0 0
    %608 = vmatprep.subr.bf16.mxu0 0
    %609 = vmatpush1.bf16.msra.mxu0 0
    %610 = vmatprep.mubr.bf16.mxu0 0
    %611 = vmatmul.mubr.bf16.gmra.mrb[0].mxu0 %v576
    %v612 = vpop.f32.mrb[0].mxu0
    %v613 = vadd.f32 0.0, %v612
    %v614 = vpop.f32.mrb[0].mxu0
    %v615 = vpop.f32.mrb[0].mxu0
    %v616 = vpop.f32.mrb[0].mxu0
    %617 = vdwg.mxu0
    %v618 = vadd.f32 %v557, %v613
    %s619 = scalar_lea.vmem %s5, 24
    %v620 = vld [vmem:[%s619] sm:$0xf]
    %v621 = vld [vmem:[%s619 + $0x4] sm:$0xf]
    %v622 = vrot.slane %v455, 3
    %v623 = vrot.slane %v456, 2
    %v624 = vsel %vm458, %v623, %v622
    %v625 = vpack.c.b16 %v624, %v624
    %v628 = vunpack.c.l.b16 %v620
    %v629 = vunpack.c.l.b16 %v621
    %v630 = vpack.c.b16 %v629, %v628
    %v633 = vsel %vm285, %v625, 0
    %635 = vmatprep.subr.bf16.mxu0 0
    %636 = vmatpush1.bf16.msra.mxu0 %v630
    %637 = vmatprep.subr.bf16.mxu0 0
    %638 = vmatpush1.bf16.msra.mxu0 0
    %639 = vmatprep.subr.bf16.mxu0 0
    %640 = vmatpush1.bf16.msra.mxu0 0
    %641 = vmatprep.subr.bf16.mxu0 0
    %642 = vmatpush1.bf16.msra.mxu0 0
    %643 = vmatprep.subr.bf16.mxu0 0
    %644 = vmatpush1.bf16.msra.mxu0 0
    %645 = vmatprep.subr.bf16.mxu0 0
    %646 = vmatpush1.bf16.msra.mxu0 0
    %647 = vmatprep.subr.bf16.mxu0 0
    %648 = vmatpush1.bf16.msra.mxu0 0
    %649 = vmatprep.subr.bf16.mxu0 0
    %650 = vmatpush1.bf16.msra.mxu0 0
    %651 = vmatprep.subr.bf16.mxu0 0
    %652 = vmatpush1.bf16.msra.mxu0 0
    %653 = vmatprep.subr.bf16.mxu0 0
    %654 = vmatpush1.bf16.msra.mxu0 0
    %655 = vmatprep.subr.bf16.mxu0 0
    %656 = vmatpush1.bf16.msra.mxu0 0
    %657 = vmatprep.subr.bf16.mxu0 0
    %658 = vmatpush1.bf16.msra.mxu0 0
    %659 = vmatprep.subr.bf16.mxu0 0
    %660 = vmatpush1.bf16.msra.mxu0 0
    %661 = vmatprep.subr.bf16.mxu0 0
    %662 = vmatpush1.bf16.msra.mxu0 0
    %663 = vmatprep.subr.bf16.mxu0 0
    %664 = vmatpush1.bf16.msra.mxu0 0
    %665 = vmatprep.subr.bf16.mxu0 0
    %666 = vmatpush1.bf16.msra.mxu0 0
    %667 = vmatprep.mubr.bf16.mxu0 0
    %668 = vmatmul.mubr.bf16.gmra.mrb[0].mxu0 %v633
    %v669 = vpop.f32.mrb[0].mxu0
    %v670 = vadd.f32 0.0, %v669
    %v671 = vpop.f32.mrb[0].mxu0
    %v672 = vpop.f32.mrb[0].mxu0
    %v673 = vpop.f32.mrb[0].mxu0
    %674 = vdwg.mxu0
    %v675 = vadd.f32 %v618, %v670
    %s676 = scalar_lea.vmem %s5, 32
    %v677 = vld [vmem:[%s676] sm:$0xf]
    %v678 = vld [vmem:[%s676 + $0x4] sm:$0xf]
    %v679 = vrot.slane %v455, 4
    %v680 = vrot.slane %v456, 3
    %v681 = vsel %vm458, %v680, %v679
    %v682 = vpack.c.b16 %v681, %v681
    %v685 = vunpack.c.l.b16 %v677
    %v686 = vunpack.c.l.b16 %v678
    %v687 = vpack.c.b16 %v686, %v685
    %v690 = vsel %vm285, %v682, 0
    %692 = vmatprep.subr.bf16.mxu0 0
    %693 = vmatpush1.bf16.msra.mxu0 %v687
    %694 = vmatprep.subr.bf16.mxu0 0
    %695 = vmatpush1.bf16.msra.mxu0 0
    %696 = vmatprep.subr.bf16.mxu0 0
    %697 = vmatpush1.bf16.msra.mxu0 0
    %698 = vmatprep.subr.bf16.mxu0 0
    %699 = vmatpush1.bf16.msra.mxu0 0
    %700 = vmatprep.subr.bf16.mxu0 0
    %701 = vmatpush1.bf16.msra.mxu0 0
    %702 = vmatprep.subr.bf16.mxu0 0
    %703 = vmatpush1.bf16.msra.mxu0 0
    %704 = vmatprep.subr.bf16.mxu0 0
    %705 = vmatpush1.bf16.msra.mxu0 0
    %706 = vmatprep.subr.bf16.mxu0 0
    %707 = vmatpush1.bf16.msra.mxu0 0
    %708 = vmatprep.subr.bf16.mxu0 0
    %709 = vmatpush1.bf16.msra.mxu0 0
    %710 = vmatprep.subr.bf16.mxu0 0
    %711 = vmatpush1.bf16.msra.mxu0 0
    %712 = vmatprep.subr.bf16.mxu0 0
    %713 = vmatpush1.bf16.msra.mxu0 0
    %714 = vmatprep.subr.bf16.mxu0 0
    %715 = vmatpush1.bf16.msra.mxu0 0
    %716 = vmatprep.subr.bf16.mxu0 0
    %717 = vmatpush1.bf16.msra.mxu0 0
    %718 = vmatprep.subr.bf16.mxu0 0
    %719 = vmatpush1.bf16.msra.mxu0 0
    %720 = vmatprep.subr.bf16.mxu0 0
    %721 = vmatpush1.bf16.msra.mxu0 0
    %722 = vmatprep.subr.bf16.mxu0 0
    %723 = vmatpush1.bf16.msra.mxu0 0
    %724 = vmatprep.mubr.bf16.mxu0 0
    %725 = vmatmul.mubr.bf16.gmra.mrb[0].mxu0 %v690
    %v726 = vpop.f32.mrb[0].mxu0
    %v727 = vadd.f32 0.0, %v726
    %v728 = vpop.f32.mrb[0].mxu0
    %v729 = vpop.f32.mrb[0].mxu0
    %v730 = vpop.f32.mrb[0].mxu0
    %731 = vdwg.mxu0
    %v732 = vadd.f32 %v675, %v727
    %s733 = scalar_lea.vmem %s5, 40
    %v734 = vld [vmem:[%s733] sm:$0xf]
    %v735 = vld [vmem:[%s733 + $0x4] sm:$0xf]
    %v736 = vrot.slane %v455, 5
    %v737 = vrot.slane %v456, 4
    %v738 = vsel %vm458, %v737, %v736
    %v739 = vpack.c.b16 %v738, %v738
    %v742 = vunpack.c.l.b16 %v734
    %v743 = vunpack.c.l.b16 %v735
    %v744 = vpack.c.b16 %v743, %v742
    %v747 = vsel %vm285, %v739, 0
    %749 = vmatprep.subr.bf16.mxu0 0
    %750 = vmatpush1.bf16.msra.mxu0 %v744
    %751 = vmatprep.subr.bf16.mxu0 0
    %752 = vmatpush1.bf16.msra.mxu0 0
    %753 = vmatprep.subr.bf16.mxu0 0
    %754 = vmatpush1.bf16.msra.mxu0 0
    %755 = vmatprep.subr.bf16.mxu0 0
    %756 = vmatpush1.bf16.msra.mxu0 0
    %757 = vmatprep.subr.bf16.mxu0 0
    %758 = vmatpush1.bf16.msra.mxu0 0
    %759 = vmatprep.subr.bf16.mxu0 0
    %760 = vmatpush1.bf16.msra.mxu0 0
    %761 = vmatprep.subr.bf16.mxu0 0
    %762 = vmatpush1.bf16.msra.mxu0 0
    %763 = vmatprep.subr.bf16.mxu0 0
    %764 = vmatpush1.bf16.msra.mxu0 0
    %765 = vmatprep.subr.bf16.mxu0 0
    %766 = vmatpush1.bf16.msra.mxu0 0
    %767 = vmatprep.subr.bf16.mxu0 0
    %768 = vmatpush1.bf16.msra.mxu0 0
    %769 = vmatprep.subr.bf16.mxu0 0
    %770 = vmatpush1.bf16.msra.mxu0 0
    %771 = vmatprep.subr.bf16.mxu0 0
    %772 = vmatpush1.bf16.msra.mxu0 0
    %773 = vmatprep.subr.bf16.mxu0 0
    %774 = vmatpush1.bf16.msra.mxu0 0
    %775 = vmatprep.subr.bf16.mxu0 0
    %776 = vmatpush1.bf16.msra.mxu0 0
    %777 = vmatprep.subr.bf16.mxu0 0
    %778 = vmatpush1.bf16.msra.mxu0 0
    %779 = vmatprep.subr.bf16.mxu0 0
    %780 = vmatpush1.bf16.msra.mxu0 0
    %781 = vmatprep.mubr.bf16.mxu0 0
    %782 = vmatmul.mubr.bf16.gmra.mrb[0].mxu0 %v747
    %v783 = vpop.f32.mrb[0].mxu0
    %v784 = vadd.f32 0.0, %v783
    %v785 = vpop.f32.mrb[0].mxu0
    %v786 = vpop.f32.mrb[0].mxu0
    %v787 = vpop.f32.mrb[0].mxu0
    %788 = vdwg.mxu0
    %v789 = vadd.f32 %v732, %v784
    %s790 = scalar_lea.vmem %s5, 48
    %v791 = vld [vmem:[%s790] sm:$0xf]
    %v792 = vld [vmem:[%s790 + $0x4] sm:$0xf]
    %v793 = vrot.slane %v455, 6
    %v794 = vrot.slane %v456, 5
    %v795 = vsel %vm458, %v794, %v793
    %v796 = vpack.c.b16 %v795, %v795
    %v799 = vunpack.c.l.b16 %v791
    %v800 = vunpack.c.l.b16 %v792
    %v801 = vpack.c.b16 %v800, %v799
    %v804 = vsel %vm285, %v796, 0
    %806 = vmatprep.subr.bf16.mxu0 0
    %807 = vmatpush1.bf16.msra.mxu0 %v801
    %808 = vmatprep.subr.bf16.mxu0 0
    %809 = vmatpush1.bf16.msra.mxu0 0
    %810 = vmatprep.subr.bf16.mxu0 0
    %811 = vmatpush1.bf16.msra.mxu0 0
    %812 = vmatprep.subr.bf16.mxu0 0
    %813 = vmatpush1.bf16.msra.mxu0 0
    %814 = vmatprep.subr.bf16.mxu0 0
    %815 = vmatpush1.bf16.msra.mxu0 0
    %816 = vmatprep.subr.bf16.mxu0 0
    %817 = vmatpush1.bf16.msra.mxu0 0
    %818 = vmatprep.subr.bf16.mxu0 0
    %819 = vmatpush1.bf16.msra.mxu0 0
    %820 = vmatprep.subr.bf16.mxu0 0
    %821 = vmatpush1.bf16.msra.mxu0 0
    %822 = vmatprep.subr.bf16.mxu0 0
    %823 = vmatpush1.bf16.msra.mxu0 0
    %824 = vmatprep.subr.bf16.mxu0 0
    %825 = vmatpush1.bf16.msra.mxu0 0
    %826 = vmatprep.subr.bf16.mxu0 0
    %827 = vmatpush1.bf16.msra.mxu0 0
    %828 = vmatprep.subr.bf16.mxu0 0
    %829 = vmatpush1.bf16.msra.mxu0 0
    %830 = vmatprep.subr.bf16.mxu0 0
    %831 = vmatpush1.bf16.msra.mxu0 0
    %832 = vmatprep.subr.bf16.mxu0 0
    %833 = vmatpush1.bf16.msra.mxu0 0
    %834 = vmatprep.subr.bf16.mxu0 0
    %835 = vmatpush1.bf16.msra.mxu0 0
    %836 = vmatprep.subr.bf16.mxu0 0
    %837 = vmatpush1.bf16.msra.mxu0 0
    %838 = vmatprep.mubr.bf16.mxu0 0
    %839 = vmatmul.mubr.bf16.gmra.mrb[0].mxu0 %v804
    %v840 = vpop.f32.mrb[0].mxu0
    %v841 = vadd.f32 0.0, %v840
    %v842 = vpop.f32.mrb[0].mxu0
    %v843 = vpop.f32.mrb[0].mxu0
    %v844 = vpop.f32.mrb[0].mxu0
    %845 = vdwg.mxu0
    %v846 = vadd.f32 %v789, %v841
    %s847 = scalar_lea.vmem %s5, 56
    %v848 = vld [vmem:[%s847] sm:$0xf]
    %v849 = vld [vmem:[%s847 + $0x4] sm:$0xf]
    %v850 = vrot.slane %v455, 7
    %v851 = vrot.slane %v456, 6
    %v852 = vsel %vm458, %v851, %v850
    %v853 = vpack.c.b16 %v852, %v852
    %v856 = vunpack.c.l.b16 %v848
    %v857 = vunpack.c.l.b16 %v849
    %v858 = vpack.c.b16 %v857, %v856
    %v861 = vsel %vm285, %v853, 0
    %863 = vmatprep.subr.bf16.mxu0 0
    %864 = vmatpush1.bf16.msra.mxu0 %v858
    %865 = vmatprep.subr.bf16.mxu0 0
    %866 = vmatpush1.bf16.msra.mxu0 0
    %867 = vmatprep.subr.bf16.mxu0 0
    %868 = vmatpush1.bf16.msra.mxu0 0
    %869 = vmatprep.subr.bf16.mxu0 0
    %870 = vmatpush1.bf16.msra.mxu0 0
    %871 = vmatprep.subr.bf16.mxu0 0
    %872 = vmatpush1.bf16.msra.mxu0 0
    %873 = vmatprep.subr.bf16.mxu0 0
    %874 = vmatpush1.bf16.msra.mxu0 0
    %875 = vmatprep.subr.bf16.mxu0 0
    %876 = vmatpush1.bf16.msra.mxu0 0
    %877 = vmatprep.subr.bf16.mxu0 0
    %878 = vmatpush1.bf16.msra.mxu0 0
    %879 = vmatprep.subr.bf16.mxu0 0
    %880 = vmatpush1.bf16.msra.mxu0 0
    %881 = vmatprep.subr.bf16.mxu0 0
    %882 = vmatpush1.bf16.msra.mxu0 0
    %883 = vmatprep.subr.bf16.mxu0 0
    %884 = vmatpush1.bf16.msra.mxu0 0
    %885 = vmatprep.subr.bf16.mxu0 0
    %886 = vmatpush1.bf16.msra.mxu0 0
    %887 = vmatprep.subr.bf16.mxu0 0
    %888 = vmatpush1.bf16.msra.mxu0 0
    %889 = vmatprep.subr.bf16.mxu0 0
    %890 = vmatpush1.bf16.msra.mxu0 0
    %891 = vmatprep.subr.bf16.mxu0 0
    %892 = vmatpush1.bf16.msra.mxu0 0
    %893 = vmatprep.subr.bf16.mxu0 0
    %894 = vmatpush1.bf16.msra.mxu0 0
    %895 = vmatprep.mubr.bf16.mxu0 0
    %896 = vmatmul.mubr.bf16.gmra.mrb[0].mxu0 %v861
    %v897 = vpop.f32.mrb[0].mxu0
    %v898 = vadd.f32 0.0, %v897
    %v899 = vpop.f32.mrb[0].mxu0
    %v900 = vpop.f32.mrb[0].mxu0
    %v901 = vpop.f32.mrb[0].mxu0
    %902 = vdwg.mxu0
    %v903 = vadd.f32 %v846, %v898
    %v904 = vld [vmem:[%s6] sm:$0x1]
    %v906 = vlaneseq
    %v907 = vshrl.u32 %v906, 7
    %v908 = vsub.s32 0, %v907
    %v909 = vrot.slane %v904, %v908
    %v911 = vadd.f32 %v903, %v909
    %v912 = vmax.f32 %v911, 0.0
    %v913 = vpack.c.bf16 %v912, %v912
    %v914 = vld [vmem:[%s7] sm:$0xf]
    %v915 = vld [vmem:[%s7 + $0x4] sm:$0xf]
    %v916 = vld [vmem:[%s7 + $0x8] sm:$0xf]
    %v917 = vld [vmem:[%s7 + $0xc] sm:$0xf]
    %v918 = vld [vmem:[%s8] sm:$0x1]
    %v920 = vlaneseq
    %v921 = vshrl.u32 %v920, 7
    %v922 = vsub.s32 0, %v921
    %v923 = vrot.slane %v918, %v922
    %v929 = vunpack.c.l.b16 %v914
    %v930 = vunpack.c.l.b16 %v915
    %v931 = vunpack.c.l.b16 %v916
    %v932 = vunpack.c.l.b16 %v917
    %v933 = vpack.c.b16 %v930, %v929
    %v934 = vpack.c.b16 %v932, %v931
    %vm937 = vcmask 261120
    %v939 = vsel %vm937, %v913, 0
    %941 = vmatprep.subr.bf16.mxu0 0
    %942 = vmatpush1.bf16.msra.mxu0 %v933
    %943 = vmatprep.subr.bf16.mxu0 0
    %944 = vmatpush1.bf16.msra.mxu0 %v934
    %945 = vmatprep.subr.bf16.mxu0 0
    %946 = vmatpush1.bf16.msra.mxu0 0
    %947 = vmatprep.subr.bf16.mxu0 0
    %948 = vmatpush1.bf16.msra.mxu0 0
    %949 = vmatprep.subr.bf16.mxu0 0
    %950 = vmatpush1.bf16.msra.mxu0 0
    %951 = vmatprep.subr.bf16.mxu0 0
    %952 = vmatpush1.bf16.msra.mxu0 0
    %953 = vmatprep.subr.bf16.mxu0 0
    %954 = vmatpush1.bf16.msra.mxu0 0
    %955 = vmatprep.subr.bf16.mxu0 0
    %956 = vmatpush1.bf16.msra.mxu0 0
    %957 = vmatprep.subr.bf16.mxu0 0
    %958 = vmatpush1.bf16.msra.mxu0 0
    %959 = vmatprep.subr.bf16.mxu0 0
    %960 = vmatpush1.bf16.msra.mxu0 0
    %961 = vmatprep.subr.bf16.mxu0 0
    %962 = vmatpush1.bf16.msra.mxu0 0
    %963 = vmatprep.subr.bf16.mxu0 0
    %964 = vmatpush1.bf16.msra.mxu0 0
    %965 = vmatprep.subr.bf16.mxu0 0
    %966 = vmatpush1.bf16.msra.mxu0 0
    %967 = vmatprep.subr.bf16.mxu0 0
    %968 = vmatpush1.bf16.msra.mxu0 0
    %969 = vmatprep.subr.bf16.mxu0 0
    %970 = vmatpush1.bf16.msra.mxu0 0
    %971 = vmatprep.subr.bf16.mxu0 0
    %972 = vmatpush1.bf16.msra.mxu0 0
    %973 = vmatprep.mubr.bf16.mxu0 0
    %974 = vmatmul.mubr.bf16.gmra.mrb[0].mxu0 %v939
    %v975 = vpop.f32.mrb[0].mxu0
    %v976 = vadd.f32 %v923, %v975
    %v977 = vpop.f32.mrb[0].mxu0
    %v978 = vpop.f32.mrb[0].mxu0
    %v979 = vpop.f32.mrb[0].mxu0
    %980 = vdwg.mxu0
    %v981 = vmax.f32 %v976, 0.0
    %vm982 = vcmask 58368
    %983 = vst.msk [vmem:[#allocation2] sm:$0x3] %vm982, %v981
    // Predicated region
    $region38: #{temp_conv_forward.1} parent=1 // pred_check
      _
    $region39: #{temp_conv_forward.1} parent=1 // pred_check_branch
      %985 = sbr.rel (0) target = $region41
    $region40: #{temp_conv_forward.1} parent=1 // pred_region
      %s987 = ssub.s32 32, 32
      %988 = vsyncadd [#allocation3], %s987
      %s990 = sshll.u32 [#allocation2], 4
      %s991 = int_to_ptr.vmem [resolvable:$true] %s990
      %993 = dma.vmem_to_hbm [thread:$0]  %s991, 32, %s9, [#allocation3]
    $region41: #{temp_conv_forward.1} parent=1 // pred_fallthru
      _
    // Predicated region
    $region42: #{temp_conv_forward.1} parent=1 // pred_check
      _
    $region43: #{temp_conv_forward.1} parent=1 // pred_check_branch
      %995 = sbr.rel (0) target = $region45
    $region44: #{temp_conv_forward.1} parent=1 // pred_region
      %996 = dma.done [#allocation3], 32
    $region45: #{temp_conv_forward.1} parent=1 // pred_fallthru
      _
    %997 = vsyncpa [#allocation3], 1

</llo_original>
